<compile_context>
chip_gen: v7x
topology: tpu7x:2x2x1
jax: 0.10.0
libtpu: 0.0.40
codegen_flags: <defaults>
</compile_context>

<pallas_src>
import functools

import jax
import jax.numpy as jnp
from jax.experimental import pallas as pl
from jax.experimental.pallas import tpu as pltpu


def _zinb_decoder_kernel(z_ref, w1_ref, b1_ref,
                         w2m_ref, b2m_ref, w2t_ref, b2t_ref, w2p_ref, b2p_ref,
                         r_ref, p_ref, pi_ref, h_ref, *, approx_reciprocal):
    """One (batch tile, feature tile) step of the fused ZINB decoder."""

    # Hidden layer: compute once per batch tile, persist across feature tiles.
    @pl.when(pl.program_id(1) == 0)
    def _():
        h = jnp.dot(z_ref[...], w1_ref[...],
                    preferred_element_type=jnp.float32) + b1_ref[...]
        h_ref[...] = jnp.maximum(h, 0.0)

    # Second layer for this feature tile (one matmul per ZINB parameter chunk).
    h = h_ref[...].astype(w2m_ref.dtype)
    mu_logits = jnp.dot(h, w2m_ref[...],
                        preferred_element_type=jnp.float32) + b2m_ref[...]
    theta_logits = jnp.dot(h, w2t_ref[...],
                           preferred_element_type=jnp.float32) + b2t_ref[...]
    pi_logits = jnp.dot(h, w2p_ref[...],
                        preferred_element_type=jnp.float32) + b2p_ref[...]

    # ZINB parameterization (all f32, VPU/EUP).
    mu = jax.nn.softplus(mu_logits)
    theta = jax.nn.softplus(theta_logits) + 1e-4
    pi = jax.nn.sigmoid(pi_logits)

    denom = theta + mu
    if approx_reciprocal:
        p = theta * pl.reciprocal(denom, approx=True)
    else:
        p = theta / denom
    p = jnp.clip(p, 1e-5, 1.0 - 1e-5)

    r_ref[...] = theta      # total_count
    p_ref[...] = p          # probs
    pi_ref[...] = pi        # zero-inflation probability


def _round_up(x, m):
    return (x + m - 1) // m * m


def zinb_decoder_forward(z, w1, b1, w2, b2, *, tile_b=None, tile_f=None,
                         matmul_dtype=None, approx_reciprocal=True):
    """Returns (r, p, pi) — the parameters of the ZINB distribution.

    z: (B, Dz), w1: (Dz, H), b1: (H,)|(1,H), w2: (H, 3F), b2: (3F,)|(1,3F).
    """
    B, Dz = z.shape
    H = w1.shape[1]
    F3 = w2.shape[1]
    assert F3 % 3 == 0
    F = F3 // 3

    # ---- tiling (lane-dense feature tiles, pipelined batch tiles) ----
    if tile_b is None:
        tile_b = min(_round_up(B, 8), 256)
    tile_b = _round_up(tile_b, 8)
    Bp = _round_up(B, tile_b)

    if tile_f is None:
        tile_f = min(_round_up(F, 128), 512)
    tile_f = _round_up(tile_f, 128)
    Fp = _round_up(F, tile_f)

    mm_dtype = z.dtype if matmul_dtype is None else jnp.dtype(matmul_dtype)

    # ---- wrapper-side padding / chunking (layout plumbing, not compute) ----
    z_p = z if Bp == B else jnp.pad(z, ((0, Bp - B), (0, 0)))
    z_p = z_p.astype(mm_dtype)
    w1_c = w1.astype(mm_dtype)
    b1_c = jnp.asarray(b1, jnp.float32).reshape(1, H)

    def split_pad_last(a):
        """torch.chunk(a, 3, dim=-1), each chunk padded to Fp lanes."""
        chunks = [a[..., k * F:(k + 1) * F] for k in range(3)]
        if Fp != F:
            pad = [(0, 0)] * (a.ndim - 1) + [(0, Fp - F)]
            chunks = [jnp.pad(c, pad) for c in chunks]
        return chunks

    w2m, w2t, w2p = [c.astype(mm_dtype) for c in split_pad_last(w2)]
    b2m, b2t, b2p = [jnp.asarray(c, jnp.float32).reshape(1, Fp)
                     for c in split_pad_last(jnp.reshape(b2, (1, F3)))]

    grid = (Bp // tile_b, Fp // tile_f)

    out_shape = jax.ShapeDtypeStruct((Bp, Fp), jnp.float32)
    out_spec = pl.BlockSpec((tile_b, tile_f), lambda bi, fi: (bi, fi))
    w2_spec = pl.BlockSpec((H, tile_f), lambda bi, fi: (0, fi))
    b2_spec = pl.BlockSpec((1, tile_f), lambda bi, fi: (0, fi))

    # Scoped-VMEM request from the actual per-step footprint (double-buffered
    # inputs/outputs + scratch), with 2x headroom, clamped to [16, 64] MiB.
    mm_bytes = jnp.dtype(mm_dtype).itemsize
    per_step = (
        2 * tile_b * Dz * mm_bytes                            # z tile
        + 2 * (Dz * H * mm_bytes + H * 4)                     # w1, b1
        + 2 * 3 * (H * tile_f * mm_bytes + tile_f * 4)        # w2/b2 chunks
        + 2 * 3 * tile_b * tile_f * 4                         # r/p/pi tiles
        + tile_b * H * 4                                      # h scratch
    )
    vmem_limit = int(min(64 << 20, max(2 * per_step, 16 << 20)))

    kernel = functools.partial(_zinb_decoder_kernel,
                               approx_reciprocal=approx_reciprocal)

    r, p, pi = pl.pallas_call(
        kernel,
        out_shape=(out_shape, out_shape, out_shape),
        grid_spec=pltpu.PrefetchScalarGridSpec(
            num_scalar_prefetch=0,
            grid=grid,
            in_specs=[
                pl.BlockSpec((tile_b, Dz), lambda bi, fi: (bi, 0)),  # z
                pl.BlockSpec((Dz, H), lambda bi, fi: (0, 0)),        # w1
                pl.BlockSpec((1, H), lambda bi, fi: (0, 0)),         # b1
                w2_spec, b2_spec,                                     # mu chunk
                w2_spec, b2_spec,                                     # theta chunk
                w2_spec, b2_spec,                                     # pi chunk
            ],
            out_specs=[out_spec, out_spec, out_spec],
            scratch_shapes=[pltpu.VMEM((tile_b, H), jnp.float32)],
        ),
        compiler_params=pltpu.CompilerParams(
            dimension_semantics=("parallel", "arbitrary"),
            vmem_limit_bytes=vmem_limit,
        ),
    )(z_p, w1_c, b1_c, w2m, b2m, w2t, b2t, w2p, b2p)

    return r[:B, :F], p[:B, :F], pi[:B, :F]


def _reference_forward(z, w1, b1, w2, b2):
    """Plain-JAX reference matching the PyTorch semantics."""
    h = jnp.maximum(z @ w1 + jnp.reshape(b1, (1, -1)), 0.0)
    out = h @ w2 + jnp.reshape(b2, (1, -1))
    F = out.shape[-1] // 3
    mu = jax.nn.softplus(out[:, :F])
    theta = jax.nn.softplus(out[:, F:2 * F]) + 1e-4
    pi = jax.nn.sigmoid(out[:, 2 * F:])
    p = jnp.clip(theta / (theta + mu), 1e-5, 1.0 - 1e-5)
    return theta, p, pi


if __name__ == "__main__":
    def make_inputs(key, B, Dz, H, F):
        kz, kw1, kb1, kw2, kb2 = jax.random.split(key, 5)
        z = jax.random.normal(kz, (B, Dz), dtype=jnp.float32)
        lim1 = 1.0 / (Dz ** 0.5)
        lim2 = 1.0 / (H ** 0.5)
        w1 = jax.random.uniform(kw1, (Dz, H), jnp.float32, -lim1, lim1)
        b1 = jax.random.uniform(kb1, (1, H), jnp.float32, -lim1, lim1)
        w2 = jax.random.uniform(kw2, (H, 3 * F), jnp.float32, -lim2, lim2)
        b2 = jax.random.uniform(kb2, (1, 3 * F), jnp.float32, -lim2, lim2)
        return z, w1, b1, w2, b2

    key = jax.random.PRNGKey(0)
    k1, k2 = jax.random.split(key)

    # --- Case 1: aligned shapes, multi-tile grid (2 batch x 2 feature tiles) ---
    z, w1, b1, w2, b2 = make_inputs(k1, B=64, Dz=32, H=64, F=256)
    r_ref, p_ref, pi_ref = _reference_forward(z, w1, b1, w2, b2)

    # exact division, f32 matmuls -> tight tolerance
    r, p, pi = zinb_decoder_forward(z, w1, b1, w2, b2, tile_b=32, tile_f=128,
                                    approx_reciprocal=False)
    jax.block_until_ready((r, p, pi))
    assert jnp.allclose(r, r_ref, atol=1e-5, rtol=1e-5)
    assert jnp.allclose(p, p_ref, atol=1e-5, rtol=1e-5)
    assert jnp.allclose(pi, pi_ref, atol=1e-5, rtol=1e-5)

    # default fast path: approx reciprocal (p slightly approximate, clipped)
    r, p, pi = zinb_decoder_forward(z, w1, b1, w2, b2, tile_b=32, tile_f=128)
    jax.block_until_ready((r, p, pi))
    assert jnp.allclose(r, r_ref, atol=1e-5, rtol=1e-5)
    assert jnp.allclose(p, p_ref, atol=5e-3, rtol=5e-3)
    assert jnp.allclose(pi, pi_ref, atol=1e-5, rtol=1e-5)

    # bf16 matmuls (halved weight DMA, higher MXU rate), f32 elementwise
    r, p, pi = zinb_decoder_forward(z, w1, b1, w2, b2, tile_b=32, tile_f=128,
                                    matmul_dtype=jnp.bfloat16)
    jax.block_until_ready((r, p, pi))
    assert jnp.allclose(r, r_ref, atol=5e-2, rtol=5e-2)
    assert jnp.allclose(p, p_ref, atol=5e-2, rtol=5e-2)
    assert jnp.allclose(pi, pi_ref, atol=5e-2, rtol=5e-2)

    # --- Case 2: ragged shapes (B, F not tile multiples) -> pad & slice path ---
    z, w1, b1, w2, b2 = make_inputs(k2, B=50, Dz=32, H=64, F=200)
    r_ref, p_ref, pi_ref = _reference_forward(z, w1, b1, w2, b2)
    r, p, pi = zinb_decoder_forward(z, w1, b1, w2, b2, approx_reciprocal=False)
    jax.block_until_ready((r, p, pi))
    assert jnp.allclose(r, r_ref, atol=1e-5, rtol=1e-5)
    assert jnp.allclose(p, p_ref, atol=1e-5, rtol=1e-5)
    assert jnp.allclose(pi, pi_ref, atol=1e-5, rtol=1e-5)

    print("KERNEL_OK")
</pallas_src>

<mosaic_0001>
module attributes {stable_mosaic.version = 11 : i64} {
  func.func @_zinb_decoder_kernel(%arg0: i32, %arg1: i32, %arg2: memref<32x32xf32, #tpu.memory_space<vmem>>, %arg3: memref<32x64xf32, #tpu.memory_space<vmem>>, %arg4: memref<1x64xf32, #tpu.memory_space<vmem>>, %arg5: memref<64x128xf32, #tpu.memory_space<vmem>>, %arg6: memref<1x128xf32, #tpu.memory_space<vmem>>, %arg7: memref<64x128xf32, #tpu.memory_space<vmem>>, %arg8: memref<1x128xf32, #tpu.memory_space<vmem>>, %arg9: memref<64x128xf32, #tpu.memory_space<vmem>>, %arg10: memref<1x128xf32, #tpu.memory_space<vmem>>, %arg11: memref<32x128xf32, #tpu.memory_space<vmem>>, %arg12: memref<32x128xf32, #tpu.memory_space<vmem>>, %arg13: memref<32x128xf32, #tpu.memory_space<vmem>>, %arg14: memref<32x64xf32, #tpu.memory_space<vmem>>) attributes {dimension_semantics = [#tpu.dimension_semantics<parallel>, #tpu.dimension_semantics<arbitrary>], iteration_bounds = array<i64: 2, 2>, scalar_prefetch = 0 : i64, scratch_operands = 1 : i64, tpu.core_type = #tpu.core_type<tc>, window_params = [{transform_indices = @transform_0, window_bounds = array<i64: 32, 32>}, {pipeline_mode = #tpu.pipeline_mode<synchronous>, transform_indices = @transform_1, window_bounds = array<i64: 32, 64>}, {pipeline_mode = #tpu.pipeline_mode<synchronous>, transform_indices = @transform_2, window_bounds = array<i64: 1, 64>}, {transform_indices = @transform_3, window_bounds = array<i64: 64, 128>}, {transform_indices = @transform_4, window_bounds = array<i64: 1, 128>}, {transform_indices = @transform_5, window_bounds = array<i64: 64, 128>}, {transform_indices = @transform_6, window_bounds = array<i64: 1, 128>}, {transform_indices = @transform_7, window_bounds = array<i64: 64, 128>}, {transform_indices = @transform_8, window_bounds = array<i64: 1, 128>}, {transform_indices = @transform_9, window_bounds = array<i64: 32, 128>}, {transform_indices = @transform_10, window_bounds = array<i64: 32, 128>}, {transform_indices = @transform_11, window_bounds = array<i64: 32, 128>}]} {
    %c0_i32 = arith.constant 0 : i32
    %0 = arith.cmpi eq, %arg1, %c0_i32 : i32
    %1 = arith.extui %0 : i1 to i32
    %c0_i32_0 = arith.constant 0 : i32
    %2 = arith.cmpi ne, %1, %c0_i32_0 : i32
    scf.if %2 {
      %c0_30 = arith.constant 0 : index
      %c0_31 = arith.constant 0 : index
      %63 = vector.load %arg2[%c0_30, %c0_31] : memref<32x32xf32, #tpu.memory_space<vmem>>, vector<32x32xf32>
      %c0_32 = arith.constant 0 : index
      %c0_33 = arith.constant 0 : index
      %64 = vector.load %arg3[%c0_32, %c0_33] : memref<32x64xf32, #tpu.memory_space<vmem>>, vector<32x64xf32>
      %cst_34 = arith.constant dense<0.000000e+00> : vector<32x64xf32>
      %65 = tpu.matmul %63, %64, %cst_34 {dimension_numbers = #tpu.dot_dimension_numbers<[1], [0], [0], [1], [0, 0, 1, 1], [], []>} : vector<32x32xf32>, vector<32x64xf32>, vector<32x64xf32> -> vector<32x64xf32>
      %c0_35 = arith.constant 0 : index
      %c0_36 = arith.constant 0 : index
      %66 = vector.load %arg4[%c0_35, %c0_36] : memref<1x64xf32, #tpu.memory_space<vmem>>, vector<1x64xf32>
      %67 = vector.broadcast %66 : vector<1x64xf32> to vector<32x64xf32>
      %68 = arith.addf %65, %67 : vector<32x64xf32>
      %cst_37 = arith.constant 0.000000e+00 : f32
      %69 = vector.broadcast %cst_37 : f32 to vector<32x64xf32>
      %70 = arith.maximumf %68, %69 : vector<32x64xf32>
      %c0_38 = arith.constant 0 : index
      %c0_39 = arith.constant 0 : index
      %71 = vector.load %arg14[%c0_38, %c0_39] : memref<32x64xf32, #tpu.memory_space<vmem>>, vector<32x64xf32>
      tpu.vector_store %arg14[%c0_38, %c0_39], %70 {strides = array<i32>} : memref<32x64xf32, #tpu.memory_space<vmem>>, vector<32x64xf32>,
    } else {
    }
    %c0 = arith.constant 0 : index
    %c0_1 = arith.constant 0 : index
    %3 = vector.load %arg14[%c0, %c0_1] : memref<32x64xf32, #tpu.memory_space<vmem>>, vector<32x64xf32>
    %c0_2 = arith.constant 0 : index
    %c0_3 = arith.constant 0 : index
    %4 = vector.load %arg5[%c0_2, %c0_3] : memref<64x128xf32, #tpu.memory_space<vmem>>, vector<64x128xf32>
    %cst = arith.constant dense<0.000000e+00> : vector<32x128xf32>
    %5 = tpu.matmul %3, %4, %cst {dimension_numbers = #tpu.dot_dimension_numbers<[1], [0], [0], [1], [0, 0, 1, 1], [], []>} : vector<32x64xf32>, vector<64x128xf32>, vector<32x128xf32> -> vector<32x128xf32>
    %c0_4 = arith.constant 0 : index
    %c0_5 = arith.constant 0 : index
    %6 = vector.load %arg6[%c0_4, %c0_5] : memref<1x128xf32, #tpu.memory_space<vmem>>, vector<1x128xf32>
    %7 = vector.broadcast %6 : vector<1x128xf32> to vector<32x128xf32>
    %8 = arith.addf %5, %7 : vector<32x128xf32>
    %c0_6 = arith.constant 0 : index
    %c0_7 = arith.constant 0 : index
    %9 = vector.load %arg7[%c0_6, %c0_7] : memref<64x128xf32, #tpu.memory_space<vmem>>, vector<64x128xf32>
    %cst_8 = arith.constant dense<0.000000e+00> : vector<32x128xf32>
    %10 = tpu.matmul %3, %9, %cst_8 {dimension_numbers = #tpu.dot_dimension_numbers<[1], [0], [0], [1], [0, 0, 1, 1], [], []>} : vector<32x64xf32>, vector<64x128xf32>, vector<32x128xf32> -> vector<32x128xf32>
    %c0_9 = arith.constant 0 : index
    %c0_10 = arith.constant 0 : index
    %11 = vector.load %arg8[%c0_9, %c0_10] : memref<1x128xf32, #tpu.memory_space<vmem>>, vector<1x128xf32>
    %12 = vector.broadcast %11 : vector<1x128xf32> to vector<32x128xf32>
    %13 = arith.addf %10, %12 : vector<32x128xf32>
    %c0_11 = arith.constant 0 : index
    %c0_12 = arith.constant 0 : index
    %14 = vector.load %arg9[%c0_11, %c0_12] : memref<64x128xf32, #tpu.memory_space<vmem>>, vector<64x128xf32>
    %cst_13 = arith.constant dense<0.000000e+00> : vector<32x128xf32>
    %15 = tpu.matmul %3, %14, %cst_13 {dimension_numbers = #tpu.dot_dimension_numbers<[1], [0], [0], [1], [0, 0, 1, 1], [], []>} : vector<32x64xf32>, vector<64x128xf32>, vector<32x128xf32> -> vector<32x128xf32>
    %c0_14 = arith.constant 0 : index
    %c0_15 = arith.constant 0 : index
    %16 = vector.load %arg10[%c0_14, %c0_15] : memref<1x128xf32, #tpu.memory_space<vmem>>, vector<1x128xf32>
    %17 = vector.broadcast %16 : vector<1x128xf32> to vector<32x128xf32>
    %18 = arith.addf %15, %17 : vector<32x128xf32>
    %cst_16 = arith.constant 0.000000e+00 : f32
    %19 = vector.broadcast %cst_16 : f32 to vector<32x128xf32>
    %20 = arith.maximumf %8, %19 : vector<32x128xf32>
    %21 = vector.broadcast %cst_16 : f32 to vector<32x128xf32>
    %22 = arith.subf %8, %21 : vector<32x128xf32>
    %23 = arith.cmpf one, %22, %22 : vector<32x128xf32>
    %24 = vector.broadcast %cst_16 : f32 to vector<32x128xf32>
    %25 = arith.addf %8, %24 : vector<32x128xf32>
    %26 = math.absf %22 : vector<32x128xf32>
    %cst_17 = arith.constant 0.000000e+00 : f32
    %27 = vector.broadcast %cst_17 : f32 to vector<32x128xf32>
    %28 = arith.subf %27, %26 : vector<32x128xf32>
    %29 = math.exp %28 : vector<32x128xf32>
    %30 = math.log1p %29 : vector<32x128xf32>
    %31 = arith.addf %20, %30 : vector<32x128xf32>
    %32 = arith.select %23, %25, %31 : vector<32x128xi1>, vector<32x128xf32>
    %cst_18 = arith.constant 0.000000e+00 : f32
    %33 = vector.broadcast %cst_18 : f32 to vector<32x128xf32>
    %34 = arith.maximumf %13, %33 : vector<32x128xf32>
    %35 = vector.broadcast %cst_18 : f32 to vector<32x128xf32>
    %36 = arith.subf %13, %35 : vector<32x128xf32>
    %37 = arith.cmpf one, %36, %36 : vector<32x128xf32>
    %38 = vector.broadcast %cst_18 : f32 to vector<32x128xf32>
    %39 = arith.addf %13, %38 : vector<32x128xf32>
    %40 = math.absf %36 : vector<32x128xf32>
    %cst_19 = arith.constant 0.000000e+00 : f32
    %41 = vector.broadcast %cst_19 : f32 to vector<32x128xf32>
    %42 = arith.subf %41, %40 : vector<32x128xf32>
    %43 = math.exp %42 : vector<32x128xf32>
    %44 = math.log1p %43 : vector<32x128xf32>
    %45 = arith.addf %34, %44 : vector<32x128xf32>
    %46 = arith.select %37, %39, %45 : vector<32x128xi1>, vector<32x128xf32>
    %cst_20 = arith.constant 9.99999974E-5 : f32
    %47 = vector.broadcast %cst_20 : f32 to vector<32x128xf32>
    %48 = arith.addf %46, %47 : vector<32x128xf32>
    %49 = arith.negf %18 : vector<32x128xf32>
    %50 = math.exp %49 : vector<32x128xf32>
    %cst_21 = arith.constant 1.000000e+00 : f32
    %51 = vector.broadcast %cst_21 : f32 to vector<32x128xf32>
    %52 = arith.addf %51, %50 : vector<32x128xf32>
    %53 = arith.divf %51, %52 : vector<32x128xf32>
    %54 = arith.addf %48, %32 : vector<32x128xf32>
    %55 = arith.divf %48, %54 : vector<32x128xf32>
    %cst_22 = arith.constant 9.99999974E-6 : f32
    %cst_23 = arith.constant 0.999989986 : f32
    %56 = vector.broadcast %cst_22 : f32 to vector<32x128xf32>
    %57 = arith.maximumf %56, %55 : vector<32x128xf32>
    %58 = vector.broadcast %cst_23 : f32 to vector<32x128xf32>
    %59 = arith.minimumf %58, %57 : vector<32x128xf32>
    %c0_24 = arith.constant 0 : index
    %c0_25 = arith.constant 0 : index
    %60 = vector.load %arg11[%c0_24, %c0_25] : memref<32x128xf32, #tpu.memory_space<vmem>>, vector<32x128xf32>
    tpu.vector_store %arg11[%c0_24, %c0_25], %48 {strides = array<i32>} : memref<32x128xf32, #tpu.memory_space<vmem>>, vector<32x128xf32>,
    %c0_26 = arith.constant 0 : index
    %c0_27 = arith.constant 0 : index
    %61 = vector.load %arg12[%c0_26, %c0_27] : memref<32x128xf32, #tpu.memory_space<vmem>>, vector<32x128xf32>
    tpu.vector_store %arg12[%c0_26, %c0_27], %59 {strides = array<i32>} : memref<32x128xf32, #tpu.memory_space<vmem>>, vector<32x128xf32>,
    %c0_28 = arith.constant 0 : index
    %c0_29 = arith.constant 0 : index
    %62 = vector.load %arg13[%c0_28, %c0_29] : memref<32x128xf32, #tpu.memory_space<vmem>>, vector<32x128xf32>
    tpu.vector_store %arg13[%c0_28, %c0_29], %53 {strides = array<i32>} : memref<32x128xf32, #tpu.memory_space<vmem>>, vector<32x128xf32>,
    return
  }
  func.func @transform_0(%arg0: i32, %arg1: i32) -> (i32, i32) {
    %c0_i32 = arith.constant 0 : i32
    %c0_i32_0 = arith.constant 0 : i32
    return %arg0, %c0_i32 : i32, i32
  }
  func.func @transform_1(%arg0: i32, %arg1: i32) -> (i32, i32) {
    %c0_i32 = arith.constant 0 : i32
    %c0_i32_0 = arith.constant 0 : i32
    %c0_i32_1 = arith.constant 0 : i32
    return %c0_i32, %c0_i32_0 : i32, i32
  }
  func.func @transform_2(%arg0: i32, %arg1: i32) -> (i32, i32) {
    %c0_i32 = arith.constant 0 : i32
    %c0_i32_0 = arith.constant 0 : i32
    %c0_i32_1 = arith.constant 0 : i32
    return %c0_i32, %c0_i32_0 : i32, i32
  }
  func.func @transform_3(%arg0: i32, %arg1: i32) -> (i32, i32) {
    %c0_i32 = arith.constant 0 : i32
    %c0_i32_0 = arith.constant 0 : i32
    return %c0_i32, %arg1 : i32, i32
  }
  func.func @transform_4(%arg0: i32, %arg1: i32) -> (i32, i32) {
    %c0_i32 = arith.constant 0 : i32
    %c0_i32_0 = arith.constant 0 : i32
    return %c0_i32, %arg1 : i32, i32
  }
  func.func @transform_5(%arg0: i32, %arg1: i32) -> (i32, i32) {
    %c0_i32 = arith.constant 0 : i32
    %c0_i32_0 = arith.constant 0 : i32
    return %c0_i32, %arg1 : i32, i32
  }
  func.func @transform_6(%arg0: i32, %arg1: i32) -> (i32, i32) {
    %c0_i32 = arith.constant 0 : i32
    %c0_i32_0 = arith.constant 0 : i32
    return %c0_i32, %arg1 : i32, i32
  }
  func.func @transform_7(%arg0: i32, %arg1: i32) -> (i32, i32) {
    %c0_i32 = arith.constant 0 : i32
    %c0_i32_0 = arith.constant 0 : i32
    return %c0_i32, %arg1 : i32, i32
  }
  func.func @transform_8(%arg0: i32, %arg1: i32) -> (i32, i32) {
    %c0_i32 = arith.constant 0 : i32
    %c0_i32_0 = arith.constant 0 : i32
    return %c0_i32, %arg1 : i32, i32
  }
  func.func @transform_9(%arg0: i32, %arg1: i32) -> (i32, i32) {
    %c0_i32 = arith.constant 0 : i32
    return %arg0, %arg1 : i32, i32
  }
  func.func @transform_10(%arg0: i32, %arg1: i32) -> (i32, i32) {
    %c0_i32 = arith.constant 0 : i32
    return %arg0, %arg1 : i32, i32
  }
  func.func @transform_11(%arg0: i32, %arg1: i32) -> (i32, i32) {
    %c0_i32 = arith.constant 0 : i32
    return %arg0, %arg1 : i32, i32
  }
}

</mosaic_0001>

<llo_original>
// kernel: tpu_custom_call.1
$region0: #{tpu_custom_call.1}
  #allocation0 [shape = 'u32[]', space=smem, size = 0x4, offset = 0x4, fixed_abs, tag = 'smem constant byte address 0x4 - core index']
  #allocation1 [shape = 'u32[144,128]{1,0:T(1,128)}', space=vmem, size = 0x12000, scoped, tag = 'internal scratch']
  #allocation2 [shape = 'f32[32,64]{1,0:T(8,128)}', space=vmem, size = 0x4000, scoped, tag = 'scratch operand']
  %s0 = inlined_call_operand.vmem [shape: f32[64,32], index: 0, kind: input, shape index: {}]
  %s1 = inlined_call_operand.vmem [shape: f32[32,64], index: 1, kind: input, shape index: {}]
  %s2 = inlined_call_operand.vmem [shape: f32[1,64], index: 2, kind: input, shape index: {}]
  %s3 = inlined_call_operand.hbm [shape: f32[64,256], index: 3, kind: input, shape index: {}]
  %s4 = inlined_call_operand.vmem [shape: f32[1,256], index: 4, kind: input, shape index: {}]
  %s5 = inlined_call_operand.hbm [shape: f32[64,256], index: 5, kind: input, shape index: {}]
  %s6 = inlined_call_operand.vmem [shape: f32[1,256], index: 6, kind: input, shape index: {}]
  %s7 = inlined_call_operand.hbm [shape: f32[64,256], index: 7, kind: input, shape index: {}]
  %s8 = inlined_call_operand.vmem [shape: f32[1,256], index: 8, kind: input, shape index: {}]
  %s9 = inlined_call_operand.hbm [shape: f32[64,256], index: 9, kind: output, shape index: {0}]
  %s10 = inlined_call_operand.hbm [shape: f32[64,256], index: 10, kind: output, shape index: {1}]
  %s11 = inlined_call_operand.hbm [shape: f32[64,256], index: 11, kind: output, shape index: {2}]
  %12 = xla_tuple %s9, %s10, %s11
  %s13 = sld [smem:[#allocation0]]
  $region101: #{tpu_custom_call.1} parent=0
    _
  %s15 = ssub.s32 1, %s13
  %s16 = scalar_select 0, %s15, %s13
  $region1: #{tpu_custom_call.1} parent=0
    #allocation3 [shape = 'u8[65536]{0}', space=vmem, size = 0x10000, scoped, tag = 'input window, operand 3']
    #allocation4 [shape = 's32[2]{0}', space=sflag, size = 0x8, scoped, tag = 'scoped memory for tpu_custom_call.1']
    #allocation5 [shape = 's32[2]{0}', space=sflag, size = 0x8, scoped, tag = 'scoped memory for tpu_custom_call.1']
    #allocation6 [shape = 'u8[65536]{0}', space=vmem, size = 0x10000, scoped, tag = 'input window, operand 5']
    #allocation7 [shape = 's32[2]{0}', space=sflag, size = 0x8, scoped, tag = 'scoped memory for tpu_custom_call.1']
    #allocation8 [shape = 'u8[65536]{0}', space=vmem, size = 0x10000, scoped, tag = 'input window, operand 7']
    #allocation9 [shape = 'u8[32768]{0}', space=vmem, size = 0x8000, scoped, tag = 'output window, operand 0']
    #allocation10 [shape = 'u8[32768]{0}', space=vmem, size = 0x8000, scoped, tag = 'output window, operand 1']
    #allocation11 [shape = 's32[2]{0}', space=sflag, size = 0x8, scoped, tag = 'scoped memory for tpu_custom_call.1']
    #allocation12 [shape = 'u8[32768]{0}', space=vmem, size = 0x8000, scoped, tag = 'output window, operand 2']
    %17 = vsyncpa [#allocation4], 0
    %s18 = scalar_lea.sflag [#allocation4], 1
    %19 = vsyncpa %s18, 0
    %20 = vsyncpa [#allocation7], 0
    %s21 = scalar_lea.sflag [#allocation7], 1
    %22 = vsyncpa %s21, 0
    %23 = vsyncpa [#allocation5], 0
    %s24 = scalar_lea.sflag [#allocation5], 1
    %25 = vsyncpa %s24, 0
    %26 = vsyncpa [#allocation11], 0
    %s27 = scalar_lea.sflag [#allocation11], 1
    %28 = vsyncpa %s27, 0
    loop: start=0, step=1, limit=6
    $region2: #{tpu_custom_call.1} parent=1 // loop_pre_header
      _
    $region3: #{tpu_custom_call.1} parent=1 // loop_header
      %s30 = sphi 0, %s34
      %p31 = scmp.ge.s32.totalorder %s30, 6
      %s37 = sphi 0, %s49
      %s38 = sphi 0, %s45
      %s39 = sphi 0, %s37
      %s40 = sphi 0, %s38
      %s41 = sphi 0, %s39
      %s42 = sphi 0, %s40
      %s52 = sphi 0, %s54
      %s55 = sphi 0, %s52
      %s56 = sphi 0, %s55
      %s72 = sphi 0, %s56
      %s76 = sphi 0, %s76
      %s78 = sphi 0, %s76
      %s79 = sphi 0, %s78
      %s93 = sphi 0, %s79
      %s97 = sphi 0, %s97
      %s99 = sphi 0, %s97
      %s100 = sphi 0, %s99
      %s114 = sphi 0, %s100
      %s120 = sphi 0, %s122
      %s123 = sphi 0, %s120
      %s124 = sphi 0, %s123
      %s140 = sphi 0, %s124
      %s146 = sphi 0, %s148
      %s149 = sphi 0, %s146
      %s150 = sphi 0, %s149
      %s166 = sphi 0, %s150
      %s172 = sphi 0, %s174
      %s175 = sphi 0, %s172
      %s176 = sphi 0, %s175
      %s192 = sphi 0, %s176
      %s198 = sphi 0, %s200
      %s201 = sphi 0, %s198
      %s202 = sphi 0, %s201
      %s218 = sphi 0, %s202
      %s224 = sphi 0, %s226
      %s227 = sphi 0, %s224
      %s228 = sphi 0, %s227
      %s244 = sphi 0, %s228
      %s250 = sphi 0, %s252
      %s253 = sphi 0, %s250
      %s254 = sphi 0, %s253
      %s270 = sphi 0, %s254
      %s278 = sphi 0, %s280
      %s281 = sphi 0, %s278
      %s282 = sphi 0, %s281
      %s298 = sphi 0, %s282
      %s306 = sphi 0, %s308
      %s309 = sphi 0, %s306
      %s310 = sphi 0, %s309
      %s326 = sphi 0, %s310
      %s334 = sphi 0, %s336
      %s337 = sphi 0, %s334
      %s338 = sphi 0, %s337
      %s354 = sphi 0, %s338
    $region4: #{tpu_custom_call.1} parent=1 // loop_header_branch
      %33 = sbr.rel (%p31) target = $region8
    $region5: #{tpu_custom_call.1} parent=1 // loop_body
      %s35 = ssub.s32 %s30, 1
      %s36 = ssub.s32 %s30, 2
      %s43 = sadd.s32 1, %s38
      %p44 = scmp.ge.s32.totalorder %s43, 2
      %s45 = scalar_select %p44, 0, %s43
      %s46 = sadd.s32 1, %s37
      %s47 = scalar_select %p44, %s46, %s37
      %p48 = scmp.ge.s32.totalorder %s47, 2
      %s49 = scalar_select %p48, 0, %s47
      %s50 = ssub.s32 %s37, %s49
      %p51 = scmp.eq.s32.totalorder %s50, 0
      %s53 = sadd.s32 %s52, 1
      %s54 = scalar_select %p51, %s52, %s53
      %p57 = pneg %p51
      %p58 = scmp.eq.s32.totalorder %s30, 3
      %p59 = por %p57, %p58
      %p60 = scmp.ne.s32.totalorder %s52, %s55
      %p61 = scmp.eq.s32.totalorder %s30, 0
      %p62 = por %p60, %p61
      %p63 = scmp.ne.s32.totalorder %s52, %s55
      %p64 = scmp.eq.s32.totalorder %s35, 3
      %p65 = por %p63, %p64
      %p66 = scmp.ne.s32.totalorder %s55, %s56
      %p67 = scmp.eq.s32.totalorder %s35, 0
      %p68 = por %p66, %p67
      %p69 = scmp.ne.s32.totalorder %s55, %s56
      %p70 = scmp.eq.s32.totalorder %s36, 3
      %p71 = por %p69, %p70
      %p73 = scmp.ne.s32.totalorder %s56, %s72
      %p74 = scmp.eq.s32.totalorder %s36, 0
      %p75 = por %p73, %p74
      %s77 = sadd.s32 %s76, 1
      %p80 = scmp.eq.s32.totalorder %s30, 3
      %p81 = scmp.ne.s32.totalorder %s76, %s78
      %p82 = scmp.eq.s32.totalorder %s30, 0
      %p83 = por %p81, %p82
      %p84 = scmp.ne.s32.totalorder %s76, %s78
      %p85 = scmp.eq.s32.totalorder %s35, 3
      %p86 = por %p84, %p85
      %p87 = scmp.ne.s32.totalorder %s78, %s79
      %p88 = scmp.eq.s32.totalorder %s35, 0
      %p89 = por %p87, %p88
      %p90 = scmp.ne.s32.totalorder %s78, %s79
      %p91 = scmp.eq.s32.totalorder %s36, 3
      %p92 = por %p90, %p91
      %p94 = scmp.ne.s32.totalorder %s79, %s93
      %p95 = scmp.eq.s32.totalorder %s36, 0
      %p96 = por %p94, %p95
      %s98 = sadd.s32 %s97, 1
      %p101 = scmp.eq.s32.totalorder %s30, 3
      %p102 = scmp.ne.s32.totalorder %s97, %s99
      %p103 = scmp.eq.s32.totalorder %s30, 0
      %p104 = por %p102, %p103
      %p105 = scmp.ne.s32.totalorder %s97, %s99
      %p106 = scmp.eq.s32.totalorder %s35, 3
      %p107 = por %p105, %p106
      %p108 = scmp.ne.s32.totalorder %s99, %s100
      %p109 = scmp.eq.s32.totalorder %s35, 0
      %p110 = por %p108, %p109
      %p111 = scmp.ne.s32.totalorder %s99, %s100
      %p112 = scmp.eq.s32.totalorder %s36, 3
      %p113 = por %p111, %p112
      %p115 = scmp.ne.s32.totalorder %s100, %s114
      %p116 = scmp.eq.s32.totalorder %s36, 0
      %p117 = por %p115, %p116
      %s118 = ssub.s32 %s38, %s45
      %p119 = scmp.eq.s32.totalorder %s118, 0
      %s121 = sadd.s32 %s120, 1
      %s122 = scalar_select %p119, %s120, %s121
      %p125 = pneg %p119
      %p126 = scmp.eq.s32.totalorder %s30, 3
      %p127 = por %p125, %p126
      %p128 = scmp.ne.s32.totalorder %s120, %s123
      %p129 = scmp.eq.s32.totalorder %s30, 0
      %p130 = por %p128, %p129
      %p131 = scmp.ne.s32.totalorder %s120, %s123
      %p132 = scmp.eq.s32.totalorder %s35, 3
      %p133 = por %p131, %p132
      %p134 = scmp.ne.s32.totalorder %s123, %s124
      %p135 = scmp.eq.s32.totalorder %s35, 0
      %p136 = por %p134, %p135
      %p137 = scmp.ne.s32.totalorder %s123, %s124
      %p138 = scmp.eq.s32.totalorder %s36, 3
      %p139 = por %p137, %p138
      %p141 = scmp.ne.s32.totalorder %s124, %s140
      %p142 = scmp.eq.s32.totalorder %s36, 0
      %p143 = por %p141, %p142
      %s144 = ssub.s32 %s38, %s45
      %p145 = scmp.eq.s32.totalorder %s144, 0
      %s147 = sadd.s32 %s146, 1
      %s148 = scalar_select %p145, %s146, %s147
      %p151 = pneg %p145
      %p152 = scmp.eq.s32.totalorder %s30, 3
      %p153 = por %p151, %p152
      %p154 = scmp.ne.s32.totalorder %s146, %s149
      %p155 = scmp.eq.s32.totalorder %s30, 0
      %p156 = por %p154, %p155
      %p157 = scmp.ne.s32.totalorder %s146, %s149
      %p158 = scmp.eq.s32.totalorder %s35, 3
      %p159 = por %p157, %p158
      %p160 = scmp.ne.s32.totalorder %s149, %s150
      %p161 = scmp.eq.s32.totalorder %s35, 0
      %p162 = por %p160, %p161
      %p163 = scmp.ne.s32.totalorder %s149, %s150
      %p164 = scmp.eq.s32.totalorder %s36, 3
      %p165 = por %p163, %p164
      %p167 = scmp.ne.s32.totalorder %s150, %s166
      %p168 = scmp.eq.s32.totalorder %s36, 0
      %p169 = por %p167, %p168
      %s170 = ssub.s32 %s38, %s45
      %p171 = scmp.eq.s32.totalorder %s170, 0
      %s173 = sadd.s32 %s172, 1
      %s174 = scalar_select %p171, %s172, %s173
      %p177 = pneg %p171
      %p178 = scmp.eq.s32.totalorder %s30, 3
      %p179 = por %p177, %p178
      %p180 = scmp.ne.s32.totalorder %s172, %s175
      %p181 = scmp.eq.s32.totalorder %s30, 0
      %p182 = por %p180, %p181
      %p183 = scmp.ne.s32.totalorder %s172, %s175
      %p184 = scmp.eq.s32.totalorder %s35, 3
      %p185 = por %p183, %p184
      %p186 = scmp.ne.s32.totalorder %s175, %s176
      %p187 = scmp.eq.s32.totalorder %s35, 0
      %p188 = por %p186, %p187
      %p189 = scmp.ne.s32.totalorder %s175, %s176
      %p190 = scmp.eq.s32.totalorder %s36, 3
      %p191 = por %p189, %p190
      %p193 = scmp.ne.s32.totalorder %s176, %s192
      %p194 = scmp.eq.s32.totalorder %s36, 0
      %p195 = por %p193, %p194
      %s196 = ssub.s32 %s38, %s45
      %p197 = scmp.eq.s32.totalorder %s196, 0
      %s199 = sadd.s32 %s198, 1
      %s200 = scalar_select %p197, %s198, %s199
      %p203 = pneg %p197
      %p204 = scmp.eq.s32.totalorder %s30, 3
      %p205 = por %p203, %p204
      %p206 = scmp.ne.s32.totalorder %s198, %s201
      %p207 = scmp.eq.s32.totalorder %s30, 0
      %p208 = por %p206, %p207
      %p209 = scmp.ne.s32.totalorder %s198, %s201
      %p210 = scmp.eq.s32.totalorder %s35, 3
      %p211 = por %p209, %p210
      %p212 = scmp.ne.s32.totalorder %s201, %s202
      %p213 = scmp.eq.s32.totalorder %s35, 0
      %p214 = por %p212, %p213
      %p215 = scmp.ne.s32.totalorder %s201, %s202
      %p216 = scmp.eq.s32.totalorder %s36, 3
      %p217 = por %p215, %p216
      %p219 = scmp.ne.s32.totalorder %s202, %s218
      %p220 = scmp.eq.s32.totalorder %s36, 0
      %p221 = por %p219, %p220
      %s222 = ssub.s32 %s38, %s45
      %p223 = scmp.eq.s32.totalorder %s222, 0
      %s225 = sadd.s32 %s224, 1
      %s226 = scalar_select %p223, %s224, %s225
      %p229 = pneg %p223
      %p230 = scmp.eq.s32.totalorder %s30, 3
      %p231 = por %p229, %p230
      %p232 = scmp.ne.s32.totalorder %s224, %s227
      %p233 = scmp.eq.s32.totalorder %s30, 0
      %p234 = por %p232, %p233
      %p235 = scmp.ne.s32.totalorder %s224, %s227
      %p236 = scmp.eq.s32.totalorder %s35, 3
      %p237 = por %p235, %p236
      %p238 = scmp.ne.s32.totalorder %s227, %s228
      %p239 = scmp.eq.s32.totalorder %s35, 0
      %p240 = por %p238, %p239
      %p241 = scmp.ne.s32.totalorder %s227, %s228
      %p242 = scmp.eq.s32.totalorder %s36, 3
      %p243 = por %p241, %p242
      %p245 = scmp.ne.s32.totalorder %s228, %s244
      %p246 = scmp.eq.s32.totalorder %s36, 0
      %p247 = por %p245, %p246
      %s248 = ssub.s32 %s38, %s45
      %p249 = scmp.eq.s32.totalorder %s248, 0
      %s251 = sadd.s32 %s250, 1
      %s252 = scalar_select %p249, %s250, %s251
      %p255 = pneg %p249
      %p256 = scmp.eq.s32.totalorder %s30, 3
      %p257 = por %p255, %p256
      %p258 = scmp.ne.s32.totalorder %s250, %s253
      %p259 = scmp.eq.s32.totalorder %s30, 0
      %p260 = por %p258, %p259
      %p261 = scmp.ne.s32.totalorder %s250, %s253
      %p262 = scmp.eq.s32.totalorder %s35, 3
      %p263 = por %p261, %p262
      %p264 = scmp.ne.s32.totalorder %s253, %s254
      %p265 = scmp.eq.s32.totalorder %s35, 0
      %p266 = por %p264, %p265
      %p267 = scmp.ne.s32.totalorder %s253, %s254
      %p268 = scmp.eq.s32.totalorder %s36, 3
      %p269 = por %p267, %p268
      %p271 = scmp.ne.s32.totalorder %s254, %s270
      %p272 = scmp.eq.s32.totalorder %s36, 0
      %p273 = por %p271, %p272
      %s274 = ssub.s32 %s37, %s49
      %s275 = ssub.s32 %s38, %s45
      %s276 = sor.u32 %s274, %s275
      %p277 = scmp.eq.s32.totalorder %s276, 0
      %s279 = sadd.s32 %s278, 1
      %s280 = scalar_select %p277, %s278, %s279
      %p283 = pneg %p277
      %p284 = scmp.eq.s32.totalorder %s30, 3
      %p285 = por %p283, %p284
      %p286 = scmp.ne.s32.totalorder %s278, %s281
      %p287 = scmp.eq.s32.totalorder %s30, 0
      %p288 = por %p286, %p287
      %p289 = scmp.ne.s32.totalorder %s278, %s281
      %p290 = scmp.eq.s32.totalorder %s35, 3
      %p291 = por %p289, %p290
      %p292 = scmp.ne.s32.totalorder %s281, %s282
      %p293 = scmp.eq.s32.totalorder %s35, 0
      %p294 = por %p292, %p293
      %p295 = scmp.ne.s32.totalorder %s281, %s282
      %p296 = scmp.eq.s32.totalorder %s36, 3
      %p297 = por %p295, %p296
      %p299 = scmp.ne.s32.totalorder %s282, %s298
      %p300 = scmp.eq.s32.totalorder %s36, 0
      %p301 = por %p299, %p300
      %s302 = ssub.s32 %s37, %s49
      %s303 = ssub.s32 %s38, %s45
      %s304 = sor.u32 %s302, %s303
      %p305 = scmp.eq.s32.totalorder %s304, 0
      %s307 = sadd.s32 %s306, 1
      %s308 = scalar_select %p305, %s306, %s307
      %p311 = pneg %p305
      %p312 = scmp.eq.s32.totalorder %s30, 3
      %p313 = por %p311, %p312
      %p314 = scmp.ne.s32.totalorder %s306, %s309
      %p315 = scmp.eq.s32.totalorder %s30, 0
      %p316 = por %p314, %p315
      %p317 = scmp.ne.s32.totalorder %s306, %s309
      %p318 = scmp.eq.s32.totalorder %s35, 3
      %p319 = por %p317, %p318
      %p320 = scmp.ne.s32.totalorder %s309, %s310
      %p321 = scmp.eq.s32.totalorder %s35, 0
      %p322 = por %p320, %p321
      %p323 = scmp.ne.s32.totalorder %s309, %s310
      %p324 = scmp.eq.s32.totalorder %s36, 3
      %p325 = por %p323, %p324
      %p327 = scmp.ne.s32.totalorder %s310, %s326
      %p328 = scmp.eq.s32.totalorder %s36, 0
      %p329 = por %p327, %p328
      %s330 = ssub.s32 %s37, %s49
      %s331 = ssub.s32 %s38, %s45
      %s332 = sor.u32 %s330, %s331
      %p333 = scmp.eq.s32.totalorder %s332, 0
      %s335 = sadd.s32 %s334, 1
      %s336 = scalar_select %p333, %s334, %s335
      %p339 = pneg %p333
      %p340 = scmp.eq.s32.totalorder %s30, 3
      %p341 = por %p339, %p340
      %p342 = scmp.ne.s32.totalorder %s334, %s337
      %p343 = scmp.eq.s32.totalorder %s30, 0
      %p344 = por %p342, %p343
      %p345 = scmp.ne.s32.totalorder %s334, %s337
      %p346 = scmp.eq.s32.totalorder %s35, 3
      %p347 = por %p345, %p346
      %p348 = scmp.ne.s32.totalorder %s337, %s338
      %p349 = scmp.eq.s32.totalorder %s35, 0
      %p350 = por %p348, %p349
      %p351 = scmp.ne.s32.totalorder %s337, %s338
      %p352 = scmp.eq.s32.totalorder %s36, 3
      %p353 = por %p351, %p352
      %p355 = scmp.ne.s32.totalorder %s338, %s354
      %p356 = scmp.eq.s32.totalorder %s36, 0
      %p357 = por %p355, %p356
      %p358 = scmp.le.s32.totalorder 1, %s30
      %p359 = scmp.lt.s32.totalorder %s30, 5
      %p360 = pnand %p358, %p359
      %p361 = pneg %p360
      // Predicated region
      $region9: #{tpu_custom_call.1} parent=5 // pred_check
        _
      $region10: #{tpu_custom_call.1} parent=5 // pred_check_branch
        %363 = sbr.rel (%p360) target = $region12
      $region11: #{tpu_custom_call.1} parent=5 // pred_region
        %s364 = ssub.s32 %s30, 1
        // Predicated region
        $region13: #{tpu_custom_call.1} parent=11 // pred_check
          %p365 = pneg %p89
        $region14: #{tpu_custom_call.1} parent=11 // pred_check_branch
          %367 = sbr.rel (%p365) target = $region16
        $region15: #{tpu_custom_call.1} parent=11 // pred_region
          _
        $region16: #{tpu_custom_call.1} parent=11 // pred_fallthru
          _
        // Predicated region
        $region17: #{tpu_custom_call.1} parent=11 // pred_check
          %p368 = pneg %p110
        $region18: #{tpu_custom_call.1} parent=11 // pred_check_branch
          %370 = sbr.rel (%p368) target = $region20
        $region19: #{tpu_custom_call.1} parent=11 // pred_region
          _
        $region20: #{tpu_custom_call.1} parent=11 // pred_fallthru
          _
      $region12: #{tpu_custom_call.1} parent=5 // pred_fallthru
        _
      %p371 = scmp.lt.s32.totalorder %s30, 4
      // Predicated region
      $region21: #{tpu_custom_call.1} parent=5 // pred_check
        %p372 = pneg %p371
      $region22: #{tpu_custom_call.1} parent=5 // pred_check_branch
        %374 = sbr.rel (%p372) target = $region24
      $region23: #{tpu_custom_call.1} parent=5 // pred_region
        // Predicated region
        $region25: #{tpu_custom_call.1} parent=23 // pred_check
          %p375 = pneg %p62
        $region26: #{tpu_custom_call.1} parent=23 // pred_check_branch
          %377 = sbr.rel (%p375) target = $region28
        $region27: #{tpu_custom_call.1} parent=23 // pred_region
          %s378 = smul.u32 4, %s37
          %p379 = scmp.lt.s32.totalorder %s378, 7
          %s380 = scalar_select %p379, %s378, 7
          %s381 = smul.addr %s380, 8
          %s382 = scalar_lea.vmem %s0, %s381
          %s383 = smul.u32 4, %s37
        $region28: #{tpu_custom_call.1} parent=23 // pred_fallthru
          _
        // Predicated region
        $region29: #{tpu_custom_call.1} parent=23 // pred_check
          %p384 = pneg %p130
        $region30: #{tpu_custom_call.1} parent=23 // pred_check_branch
          %386 = sbr.rel (%p384) target = $region32
        $region31: #{tpu_custom_call.1} parent=23 // pred_region
          %s387 = sand.u32 %s120, 1
          %s388 = scalar_lea.sflag [#allocation4], %s387
          %s389 = sand.u32 %s120, 1
          %s390 = smul.addr %s389, 64
          %s391 = scalar_lea.vmem [#allocation3], %s390
          %s393 = ssub.s32 1024, 1024
          %394 = vsyncadd %s388, %s393
          %s395 = smul.addr %s38, 128
          %s396 = scalar_lea.hbm %s3, %s395
          %s397 = sshll.u32 %s391, 4
          %s398 = int_to_ptr.vmem [resolvable:$true] %s397
          %403 = dma.hbm_to_vmem [thread:$0]  %s396, 1024, %s398, %s388, 256, 128, 8
        $region32: #{tpu_custom_call.1} parent=23 // pred_fallthru
          _
        // Predicated region
        $region33: #{tpu_custom_call.1} parent=23 // pred_check
          %p404 = pneg %p156
        $region34: #{tpu_custom_call.1} parent=23 // pred_check_branch
          %406 = sbr.rel (%p404) target = $region36
        $region35: #{tpu_custom_call.1} parent=23 // pred_region
          %p407 = scmp.lt.s32.totalorder %s38, 1
          %s408 = scalar_select %p407, %s38, 1
          %s409 = scalar_lea.vmem %s4, %s408
        $region36: #{tpu_custom_call.1} parent=23 // pred_fallthru
          _
        // Predicated region
        $region37: #{tpu_custom_call.1} parent=23 // pred_check
          %p410 = pneg %p182
        $region38: #{tpu_custom_call.1} parent=23 // pred_check_branch
          %412 = sbr.rel (%p410) target = $region40
        $region39: #{tpu_custom_call.1} parent=23 // pred_region
          %s413 = sand.u32 %s30, 1
          %s414 = scalar_lea.sflag [#allocation7], %s413
          %s415 = sand.u32 %s172, 1
          %s416 = smul.addr %s415, 64
          %s417 = scalar_lea.vmem [#allocation6], %s416
          %s419 = ssub.s32 1024, 1024
          %420 = vsyncadd %s414, %s419
          %s421 = smul.addr %s38, 128
          %s422 = scalar_lea.hbm %s5, %s421
          %s423 = sshll.u32 %s417, 4
          %s424 = int_to_ptr.vmem [resolvable:$true] %s423
          %429 = dma.hbm_to_vmem [thread:$0]  %s422, 1024, %s424, %s414, 256, 128, 8
        $region40: #{tpu_custom_call.1} parent=23 // pred_fallthru
          _
        // Predicated region
        $region41: #{tpu_custom_call.1} parent=23 // pred_check
          %p430 = pneg %p208
        $region42: #{tpu_custom_call.1} parent=23 // pred_check_branch
          %432 = sbr.rel (%p430) target = $region44
        $region43: #{tpu_custom_call.1} parent=23 // pred_region
          %p433 = scmp.lt.s32.totalorder %s38, 1
          %s434 = scalar_select %p433, %s38, 1
          %s435 = scalar_lea.vmem %s6, %s434
        $region44: #{tpu_custom_call.1} parent=23 // pred_fallthru
          _
        // Predicated region
        $region45: #{tpu_custom_call.1} parent=23 // pred_check
          %p436 = pneg %p234
        $region46: #{tpu_custom_call.1} parent=23 // pred_check_branch
          %438 = sbr.rel (%p436) target = $region48
        $region47: #{tpu_custom_call.1} parent=23 // pred_region
          %s439 = sand.u32 %s30, 1
          %s440 = scalar_lea.sflag [#allocation7], %s439
          %s441 = sand.u32 %s224, 1
          %s442 = smul.addr %s441, 64
          %s443 = scalar_lea.vmem [#allocation8], %s442
          %s445 = ssub.s32 1024, 1024
          %446 = vsyncadd %s440, %s445
          %s447 = smul.addr %s38, 128
          %s448 = scalar_lea.hbm %s7, %s447
          %s449 = sshll.u32 %s443, 4
          %s450 = int_to_ptr.vmem [resolvable:$true] %s449
          %455 = dma.hbm_to_vmem [thread:$0]  %s448, 1024, %s450, %s440, 256, 128, 8
        $region48: #{tpu_custom_call.1} parent=23 // pred_fallthru
          _
        // Predicated region
        $region49: #{tpu_custom_call.1} parent=23 // pred_check
          %p456 = pneg %p260
        $region50: #{tpu_custom_call.1} parent=23 // pred_check_branch
          %458 = sbr.rel (%p456) target = $region52
        $region51: #{tpu_custom_call.1} parent=23 // pred_region
          %p459 = scmp.lt.s32.totalorder %s38, 1
          %s460 = scalar_select %p459, %s38, 1
          %s461 = scalar_lea.vmem %s8, %s460
        $region52: #{tpu_custom_call.1} parent=23 // pred_fallthru
          _
      $region24: #{tpu_custom_call.1} parent=5 // pred_fallthru
        _
      %p462 = scmp.le.s32.totalorder 1, %s30
      %p463 = scmp.lt.s32.totalorder %s30, 5
      %p464 = pnand %p462, %p463
      %p465 = pneg %p464
      // Predicated region
      $region53: #{tpu_custom_call.1} parent=5 // pred_check
        _
      $region54: #{tpu_custom_call.1} parent=5 // pred_check_branch
        %467 = sbr.rel (%p464) target = $region56
      $region55: #{tpu_custom_call.1} parent=5 // pred_region
        %s468 = ssub.s32 %s30, 1
        %s469 = sand.u32 %s123, 1
        %s470 = scalar_lea.sflag [#allocation4], %s469
        %s471 = sand.u32 %s123, 1
        %s472 = smul.addr %s471, 64
        %s473 = scalar_lea.vmem [#allocation3], %s472
        // Predicated region
        $region57: #{tpu_custom_call.1} parent=55 // pred_check
          %p474 = pneg %p136
        $region58: #{tpu_custom_call.1} parent=55 // pred_check_branch
          %476 = sbr.rel (%p474) target = $region60
        $region59: #{tpu_custom_call.1} parent=55 // pred_region
          %477 = dma.done %s470, 1024
        $region60: #{tpu_custom_call.1} parent=55 // pred_fallthru
          _
        %s478 = sand.u32 %s35, 1
        %s479 = scalar_lea.sflag [#allocation7], %s478
        %s480 = sand.u32 %s175, 1
        %s481 = smul.addr %s480, 64
        %s482 = scalar_lea.vmem [#allocation6], %s481
        // Predicated region
        $region61: #{tpu_custom_call.1} parent=55 // pred_check
          %p483 = pneg %p188
        $region62: #{tpu_custom_call.1} parent=55 // pred_check_branch
          %485 = sbr.rel (%p483) target = $region64
        $region63: #{tpu_custom_call.1} parent=55 // pred_region
          %486 = dma.done %s479, 1024
        $region64: #{tpu_custom_call.1} parent=55 // pred_fallthru
          _
        %s487 = sand.u32 %s35, 1
        %s488 = scalar_lea.sflag [#allocation7], %s487
        %s489 = sand.u32 %s227, 1
        %s490 = smul.addr %s489, 64
        %s491 = scalar_lea.vmem [#allocation8], %s490
        // Predicated region
        $region65: #{tpu_custom_call.1} parent=55 // pred_check
          %p492 = pneg %p240
        $region66: #{tpu_custom_call.1} parent=55 // pred_check_branch
          %494 = sbr.rel (%p492) target = $region68
        $region67: #{tpu_custom_call.1} parent=55 // pred_region
          %495 = dma.done %s488, 1024
        $region68: #{tpu_custom_call.1} parent=55 // pred_fallthru
          _
        %s496 = smul.u32 4, %s39
        %p497 = scmp.lt.s32.totalorder %s496, 7
        %s498 = scalar_select %p497, %s496, 7
        %s499 = smul.addr %s498, 8
        %s500 = scalar_lea.vmem %s0, %s499
        %p501 = pneg %p68
        %p502 = pneg %p65
        %p503 = pneg %p89
        %p504 = pneg %p86
        %p505 = pneg %p110
        %p506 = pneg %p107
        %s507 = sand.u32 %s123, 1
        %s508 = scalar_lea.sflag [#allocation4], %s507
        %s509 = sand.u32 %s123, 1
        %s510 = smul.addr %s509, 64
        %s511 = scalar_lea.vmem [#allocation3], %s510
        %p512 = pneg %p136
        %p513 = pneg %p133
        %p514 = scmp.lt.s32.totalorder %s40, 1
        %s515 = scalar_select %p514, %s40, 1
        %s516 = scalar_lea.vmem %s4, %s515
        %p517 = pneg %p162
        %p518 = pneg %p159
        %s519 = sand.u32 %s35, 1
        %s520 = scalar_lea.sflag [#allocation7], %s519
        %s521 = sand.u32 %s175, 1
        %s522 = smul.addr %s521, 64
        %s523 = scalar_lea.vmem [#allocation6], %s522
        %p524 = pneg %p188
        %p525 = pneg %p185
        %p526 = scmp.lt.s32.totalorder %s40, 1
        %s527 = scalar_select %p526, %s40, 1
        %s528 = scalar_lea.vmem %s6, %s527
        %p529 = pneg %p214
        %p530 = pneg %p211
        %s531 = sand.u32 %s35, 1
        %s532 = scalar_lea.sflag [#allocation7], %s531
        %s533 = sand.u32 %s227, 1
        %s534 = smul.addr %s533, 64
        %s535 = scalar_lea.vmem [#allocation8], %s534
        %p536 = pneg %p240
        %p537 = pneg %p237
        %p538 = scmp.lt.s32.totalorder %s40, 1
        %s539 = scalar_select %p538, %s40, 1
        %s540 = scalar_lea.vmem %s8, %s539
        %p541 = pneg %p266
        %p542 = pneg %p263
        %p543 = pneg %p294
        %p544 = pneg %p291
        %s545 = sand.u32 %s281, 1
        %s546 = scalar_lea.sflag [#allocation5], %s545
        %s547 = sand.u32 %s281, 1
        %s548 = smul.addr %s547, 32
        %s549 = scalar_lea.vmem [#allocation9], %s548
        %p550 = pneg %p322
        %p551 = pneg %p319
        %s552 = sand.u32 %s35, 1
        %s553 = scalar_lea.sflag [#allocation11], %s552
        %s554 = sand.u32 %s309, 1
        %s555 = smul.addr %s554, 32
        %s556 = scalar_lea.vmem [#allocation10], %s555
        %p557 = pneg %p350
        %p558 = pneg %p347
        %s559 = sand.u32 %s35, 1
        %s560 = scalar_lea.sflag [#allocation11], %s559
        %s561 = sand.u32 %s337, 1
        %s562 = smul.addr %s561, 32
        %s563 = scalar_lea.vmem [#allocation12], %s562
        %s564 = smul.u32 4, %s39
        %p565 = scmp.lt.s32.totalorder %s564, 7
        %s566 = scalar_select %p565, %s564, 7
        %s567 = smul.addr %s566, 8
        %s568 = scalar_lea.vmem %s0, %s567
        %s569 = smul.u32 4, %s39
        %p570 = scmp.lt.s32.totalorder %s40, 1
        %s571 = scalar_select %p570, %s40, 1
        %s572 = scalar_lea.vmem %s4, %s571
        %p573 = scmp.lt.s32.totalorder %s40, 1
        %s574 = scalar_select %p573, %s40, 1
        %s575 = scalar_lea.vmem %s6, %s574
        %p576 = scmp.lt.s32.totalorder %s40, 1
        %s577 = scalar_select %p576, %s40, 1
        %s578 = scalar_lea.vmem %s8, %s577
        %s579 = smul.u32 4, %s39
        %s580 = smul.u32 4, %s39
        %s581 = smul.u32 4, %s39
        %p582 = scmp.eq.s32.totalorder %s40, 0
        // Predicated region
        $region69: #{tpu_custom_call.1} parent=55 // pred_check
          %p583 = pneg %p582
        $region70: #{tpu_custom_call.1} parent=55 // pred_check_branch
          %585 = sbr.rel (%p583) target = $region72
        $region71: #{tpu_custom_call.1} parent=55 // pred_region
          %v586 = vld [vmem:[%s568] sm:$0xff]
          %v587 = vld [vmem:[%s568 + $0x8] sm:$0xff]
          %v588 = vld [vmem:[%s568 + $0x10] sm:$0xff]
          %v589 = vld [vmem:[%s568 + $0x18] sm:$0xff]
          %v590 = vld [vmem:[%s1] sm:$0xff]
          %v591 = vld [vmem:[%s1 + $0x8] sm:$0xff]
          %v592 = vld [vmem:[%s1 + $0x10] sm:$0xff]
          %v593 = vld [vmem:[%s1 + $0x18] sm:$0xff]
          %v594 = vld [vmem:[%s2] sm:$0x1]
          %v596 = vlaneseq
          %v597 = vshrl.u32 %v596, 7
          %v598 = vsub.s32 0, %v597
          %v599 = vrot.slane %v594, %v598
          %vm601 = vcmask 261120
          %v603 = vsel %vm601, %v586, 0
          %v606 = vsel %vm601, %v587, 0
          %v609 = vsel %vm601, %v588, 0
          %v612 = vsel %vm601, %v589, 0
          %614 = vmatprep.subr.mxu0 0.0
          %615 = vmatpush1.msra.mxu0 %v590
          %616 = vmatprep.subr.mxu0 0.0
          %617 = vmatpush1.msra.mxu0 %v591
          %618 = vmatprep.subr.mxu0 0.0
          %619 = vmatpush1.msra.mxu0 %v592
          %620 = vmatprep.subr.mxu0 0.0
          %621 = vmatpush1.msra.mxu0 %v593
          %622 = vmatprep.subr.mxu0 0.0
          %623 = vmatpush1.msra.mxu0 0.0
          %624 = vmatprep.subr.mxu0 0.0
          %625 = vmatpush1.msra.mxu0 0.0
          %626 = vmatprep.subr.mxu0 0.0
          %627 = vmatpush1.msra.mxu0 0.0
          %628 = vmatprep.subr.mxu0 0.0
          %629 = vmatpush1.msra.mxu0 0.0
          %630 = vmatprep.subr.mxu0 0.0
          %631 = vmatpush1.msra.mxu0 0.0
          %632 = vmatprep.subr.mxu0 0.0
          %633 = vmatpush1.msra.mxu0 0.0
          %634 = vmatprep.subr.mxu0 0.0
          %635 = vmatpush1.msra.mxu0 0.0
          %636 = vmatprep.subr.mxu0 0.0
          %637 = vmatpush1.msra.mxu0 0.0
          %638 = vmatprep.subr.mxu0 0.0
          %639 = vmatpush1.msra.mxu0 0.0
          %640 = vmatprep.subr.mxu0 0.0
          %641 = vmatpush1.msra.mxu0 0.0
          %642 = vmatprep.subr.mxu0 0.0
          %643 = vmatpush1.msra.mxu0 0.0
          %644 = vmatprep.subr.mxu0 0.0
          %645 = vmatpush1.msra.mxu0 0.0
          %646 = vmatprep.subr.mxu0 0.0
          %647 = vmatpush1.msra.mxu0 0.0
          %648 = vmatprep.subr.mxu0 0.0
          %649 = vmatpush1.msra.mxu0 0.0
          %650 = vmatprep.subr.mxu0 0.0
          %651 = vmatpush1.msra.mxu0 0.0
          %652 = vmatprep.subr.mxu0 0.0
          %653 = vmatpush1.msra.mxu0 0.0
          %654 = vmatprep.subr.mxu0 0.0
          %655 = vmatpush1.msra.mxu0 0.0
          %656 = vmatprep.subr.mxu0 0.0
          %657 = vmatpush1.msra.mxu0 0.0
          %658 = vmatprep.subr.mxu0 0.0
          %659 = vmatpush1.msra.mxu0 0.0
          %660 = vmatprep.subr.mxu0 0.0
          %661 = vmatpush1.msra.mxu0 0.0
          %662 = vmatprep.subr.mxu0 0.0
          %663 = vmatpush1.msra.mxu0 0.0
          %664 = vmatprep.subr.mxu0 0.0
          %665 = vmatpush1.msra.mxu0 0.0
          %666 = vmatprep.subr.mxu0 0.0
          %667 = vmatpush1.msra.mxu0 0.0
          %668 = vmatprep.subr.mxu0 0.0
          %669 = vmatpush1.msra.mxu0 0.0
          %670 = vmatprep.subr.mxu0 0.0
          %671 = vmatpush1.msra.mxu0 0.0
          %672 = vmatprep.subr.mxu0 0.0
          %673 = vmatpush1.msra.mxu0 0.0
          %674 = vmatprep.subr.mxu0 0.0
          %675 = vmatpush1.msra.mxu0 0.0
          %676 = vmatprep.subr.mxu0 0.0
          %677 = vmatpush1.msra.mxu0 0.0
          %678 = vmatprep.mubr.f32.mxu0 0.0
          %679 = vmatmul.mubr.f32.gmra.mrb[0].mxu0 %v603
          %v680 = vpop.f32.mrb[0].mxu0
          %v681 = vadd.f32 %v599, %v680
          %v682 = vpop.f32.mrb[0].mxu0
          %683 = vmatprep.mubr.f32.mxu0 0.0
          %684 = vmatmul.mubr.f32.gmra.mrb[0].mxu0 %v606
          %v685 = vpop.f32.mrb[0].mxu0
          %v686 = vadd.f32 %v599, %v685
          %v687 = vpop.f32.mrb[0].mxu0
          %688 = vmatprep.mubr.f32.mxu0 0.0
          %689 = vmatmul.mubr.f32.gmra.mrb[0].mxu0 %v609
          %v690 = vpop.f32.mrb[0].mxu0
          %v691 = vadd.f32 %v599, %v690
          %v692 = vpop.f32.mrb[0].mxu0
          %693 = vmatprep.mubr.f32.mxu0 0.0
          %694 = vmatmul.mubr.f32.gmra.mrb[0].mxu0 %v612
          %v695 = vpop.f32.mrb[0].mxu0
          %v696 = vadd.f32 %v599, %v695
          %v697 = vpop.f32.mrb[0].mxu0
          %698 = vdwg.mxu0
          %v699 = vmax.f32 %v681, 0.0
          %v700 = vmax.f32 %v686, 0.0
          %v701 = vmax.f32 %v691, 0.0
          %v702 = vmax.f32 %v696, 0.0
          %vm703 = vcmask 523264
          %704 = vst.msk [vmem:[#allocation2] sm:$0xff] %vm703, %v699
          %705 = vst.msk [vmem:[#allocation2 + $0x8] sm:$0xff] %vm703, %v700
          %706 = vst.msk [vmem:[#allocation2 + $0x10] sm:$0xff] %vm703, %v701
          %707 = vst.msk [vmem:[#allocation2 + $0x18] sm:$0xff] %vm703, %v702
        $region72: #{tpu_custom_call.1} parent=55 // pred_fallthru
          _
        %v708 = vld [vmem:[#allocation2] sm:$0xff]
        %v709 = vld [vmem:[#allocation2 + $0x8] sm:$0xff]
        %v710 = vld [vmem:[#allocation2 + $0x10] sm:$0xff]
        %v711 = vld [vmem:[#allocation2 + $0x18] sm:$0xff]
        %v712 = vld [vmem:[%s473] sm:$0xff]
        %v713 = vld [vmem:[%s473 + $0x8] sm:$0xff]
        %v714 = vld [vmem:[%s473 + $0x10] sm:$0xff]
        %v715 = vld [vmem:[%s473 + $0x18] sm:$0xff]
        %v716 = vld [vmem:[%s473 + $0x20] sm:$0xff]
        %v717 = vld [vmem:[%s473 + $0x28] sm:$0xff]
        %v718 = vld [vmem:[%s473 + $0x30] sm:$0xff]
        %v719 = vld [vmem:[%s473 + $0x38] sm:$0xff]
        %v720 = vld [vmem:[%s572] sm:$0x1]
        %v722 = vlaneseq
        %v723 = vshrl.u32 %v722, 7
        %v724 = vsub.s32 0, %v723
        %v725 = vrot.slane %v720, %v724
        %vm727 = vcmask 523264
        %v729 = vsel %vm727, %v708, 0
        %v732 = vsel %vm727, %v709, 0
        %v735 = vsel %vm727, %v710, 0
        %v738 = vsel %vm727, %v711, 0
        %740 = vmatprep.subr.mxu0 0.0
        %741 = vmatpush1.msra.mxu0 %v712
        %742 = vmatprep.subr.mxu0 0.0
        %743 = vmatpush1.msra.mxu0 %v713
        %744 = vmatprep.subr.mxu0 0.0
        %745 = vmatpush1.msra.mxu0 %v714
        %746 = vmatprep.subr.mxu0 0.0
        %747 = vmatpush1.msra.mxu0 %v715
        %748 = vmatprep.subr.mxu0 0.0
        %749 = vmatpush1.msra.mxu0 %v716
        %750 = vmatprep.subr.mxu0 0.0
        %751 = vmatpush1.msra.mxu0 %v717
        %752 = vmatprep.subr.mxu0 0.0
        %753 = vmatpush1.msra.mxu0 %v718
        %754 = vmatprep.subr.mxu0 0.0
        %755 = vmatpush1.msra.mxu0 %v719
        %756 = vmatprep.subr.mxu0 0.0
        %757 = vmatpush1.msra.mxu0 0.0
        %758 = vmatprep.subr.mxu0 0.0
        %759 = vmatpush1.msra.mxu0 0.0
        %760 = vmatprep.subr.mxu0 0.0
        %761 = vmatpush1.msra.mxu0 0.0
        %762 = vmatprep.subr.mxu0 0.0
        %763 = vmatpush1.msra.mxu0 0.0
        %764 = vmatprep.subr.mxu0 0.0
        %765 = vmatpush1.msra.mxu0 0.0
        %766 = vmatprep.subr.mxu0 0.0
        %767 = vmatpush1.msra.mxu0 0.0
        %768 = vmatprep.subr.mxu0 0.0
        %769 = vmatpush1.msra.mxu0 0.0
        %770 = vmatprep.subr.mxu0 0.0
        %771 = vmatpush1.msra.mxu0 0.0
        %772 = vmatprep.subr.mxu0 0.0
        %773 = vmatpush1.msra.mxu0 0.0
        %774 = vmatprep.subr.mxu0 0.0
        %775 = vmatpush1.msra.mxu0 0.0
        %776 = vmatprep.subr.mxu0 0.0
        %777 = vmatpush1.msra.mxu0 0.0
        %778 = vmatprep.subr.mxu0 0.0
        %779 = vmatpush1.msra.mxu0 0.0
        %780 = vmatprep.subr.mxu0 0.0
        %781 = vmatpush1.msra.mxu0 0.0
        %782 = vmatprep.subr.mxu0 0.0
        %783 = vmatpush1.msra.mxu0 0.0
        %784 = vmatprep.subr.mxu0 0.0
        %785 = vmatpush1.msra.mxu0 0.0
        %786 = vmatprep.subr.mxu0 0.0
        %787 = vmatpush1.msra.mxu0 0.0
        %788 = vmatprep.subr.mxu0 0.0
        %789 = vmatpush1.msra.mxu0 0.0
        %790 = vmatprep.subr.mxu0 0.0
        %791 = vmatpush1.msra.mxu0 0.0
        %792 = vmatprep.subr.mxu0 0.0
        %793 = vmatpush1.msra.mxu0 0.0
        %794 = vmatprep.subr.mxu0 0.0
        %795 = vmatpush1.msra.mxu0 0.0
        %796 = vmatprep.subr.mxu0 0.0
        %797 = vmatpush1.msra.mxu0 0.0
        %798 = vmatprep.subr.mxu0 0.0
        %799 = vmatpush1.msra.mxu0 0.0
        %800 = vmatprep.subr.mxu0 0.0
        %801 = vmatpush1.msra.mxu0 0.0
        %802 = vmatprep.subr.mxu0 0.0
        %803 = vmatpush1.msra.mxu0 0.0
        %804 = vmatprep.mubr.f32.mxu0 0.0
        %805 = vmatmul.mubr.f32.gmra.mrb[0].mxu0 %v729
        %v806 = vpop.f32.mrb[0].mxu0
        %v807 = vadd.f32 %v725, %v806
        %v808 = vpop.f32.mrb[0].mxu0
        %809 = vmatprep.mubr.f32.mxu0 0.0
        %810 = vmatmul.mubr.f32.gmra.mrb[0].mxu0 %v732
        %v811 = vpop.f32.mrb[0].mxu0
        %v812 = vadd.f32 %v725, %v811
        %v813 = vpop.f32.mrb[0].mxu0
        %814 = vmatprep.mubr.f32.mxu0 0.0
        %815 = vmatmul.mubr.f32.gmra.mrb[0].mxu0 %v735
        %v816 = vpop.f32.mrb[0].mxu0
        %v817 = vadd.f32 %v725, %v816
        %v818 = vpop.f32.mrb[0].mxu0
        %819 = vmatprep.mubr.f32.mxu0 0.0
        %820 = vmatmul.mubr.f32.gmra.mrb[0].mxu0 %v738
        %v821 = vpop.f32.mrb[0].mxu0
        %v822 = vadd.f32 %v725, %v821
        %v823 = vpop.f32.mrb[0].mxu0
        %824 = vdwg.mxu0
        %v825 = vld [vmem:[%s482] sm:$0xff]
        %v826 = vld [vmem:[%s482 + $0x8] sm:$0xff]
        %v827 = vld [vmem:[%s482 + $0x10] sm:$0xff]
        %v828 = vld [vmem:[%s482 + $0x18] sm:$0xff]
        %v829 = vld [vmem:[%s482 + $0x20] sm:$0xff]
        %v830 = vld [vmem:[%s482 + $0x28] sm:$0xff]
        %v831 = vld [vmem:[%s482 + $0x30] sm:$0xff]
        %v832 = vld [vmem:[%s482 + $0x38] sm:$0xff]
        %v833 = vld [vmem:[%s575] sm:$0x1]
        %v835 = vlaneseq
        %v836 = vshrl.u32 %v835, 7
        %v837 = vsub.s32 0, %v836
        %v838 = vrot.slane %v833, %v837
        %840 = vmatprep.subr.mxu0 0.0
        %841 = vmatpush1.msra.mxu0 %v825
        %842 = vmatprep.subr.mxu0 0.0
        %843 = vmatpush1.msra.mxu0 %v826
        %844 = vmatprep.subr.mxu0 0.0
        %845 = vmatpush1.msra.mxu0 %v827
        %846 = vmatprep.subr.mxu0 0.0
        %847 = vmatpush1.msra.mxu0 %v828
        %848 = vmatprep.subr.mxu0 0.0
        %849 = vmatpush1.msra.mxu0 %v829
        %850 = vmatprep.subr.mxu0 0.0
        %851 = vmatpush1.msra.mxu0 %v830
        %852 = vmatprep.subr.mxu0 0.0
        %853 = vmatpush1.msra.mxu0 %v831
        %854 = vmatprep.subr.mxu0 0.0
        %855 = vmatpush1.msra.mxu0 %v832
        %856 = vmatprep.subr.mxu0 0.0
        %857 = vmatpush1.msra.mxu0 0.0
        %858 = vmatprep.subr.mxu0 0.0
        %859 = vmatpush1.msra.mxu0 0.0
        %860 = vmatprep.subr.mxu0 0.0
        %861 = vmatpush1.msra.mxu0 0.0
        %862 = vmatprep.subr.mxu0 0.0
        %863 = vmatpush1.msra.mxu0 0.0
        %864 = vmatprep.subr.mxu0 0.0
        %865 = vmatpush1.msra.mxu0 0.0
        %866 = vmatprep.subr.mxu0 0.0
        %867 = vmatpush1.msra.mxu0 0.0
        %868 = vmatprep.subr.mxu0 0.0
        %869 = vmatpush1.msra.mxu0 0.0
        %870 = vmatprep.subr.mxu0 0.0
        %871 = vmatpush1.msra.mxu0 0.0
        %872 = vmatprep.subr.mxu0 0.0
        %873 = vmatpush1.msra.mxu0 0.0
        %874 = vmatprep.subr.mxu0 0.0
        %875 = vmatpush1.msra.mxu0 0.0
        %876 = vmatprep.subr.mxu0 0.0
        %877 = vmatpush1.msra.mxu0 0.0
        %878 = vmatprep.subr.mxu0 0.0
        %879 = vmatpush1.msra.mxu0 0.0
        %880 = vmatprep.subr.mxu0 0.0
        %881 = vmatpush1.msra.mxu0 0.0
        %882 = vmatprep.subr.mxu0 0.0
        %883 = vmatpush1.msra.mxu0 0.0
        %884 = vmatprep.subr.mxu0 0.0
        %885 = vmatpush1.msra.mxu0 0.0
        %886 = vmatprep.subr.mxu0 0.0
        %887 = vmatpush1.msra.mxu0 0.0
        %888 = vmatprep.subr.mxu0 0.0
        %889 = vmatpush1.msra.mxu0 0.0
        %890 = vmatprep.subr.mxu0 0.0
        %891 = vmatpush1.msra.mxu0 0.0
        %892 = vmatprep.subr.mxu0 0.0
        %893 = vmatpush1.msra.mxu0 0.0
        %894 = vmatprep.subr.mxu0 0.0
        %895 = vmatpush1.msra.mxu0 0.0
        %896 = vmatprep.subr.mxu0 0.0
        %897 = vmatpush1.msra.mxu0 0.0
        %898 = vmatprep.subr.mxu0 0.0
        %899 = vmatpush1.msra.mxu0 0.0
        %900 = vmatprep.subr.mxu0 0.0
        %901 = vmatpush1.msra.mxu0 0.0
        %902 = vmatprep.subr.mxu0 0.0
        %903 = vmatpush1.msra.mxu0 0.0
        %904 = vmatprep.mubr.f32.mxu0 0.0
        %905 = vmatmul.mubr.f32.gmra.mrb[0].mxu0 %v729
        %v906 = vpop.f32.mrb[0].mxu0
        %v907 = vadd.f32 %v838, %v906
        %v908 = vpop.f32.mrb[0].mxu0
        %909 = vmatprep.mubr.f32.mxu0 0.0
        %910 = vmatmul.mubr.f32.gmra.mrb[0].mxu0 %v732
        %v911 = vpop.f32.mrb[0].mxu0
        %v912 = vadd.f32 %v838, %v911
        %v913 = vpop.f32.mrb[0].mxu0
        %914 = vmatprep.mubr.f32.mxu0 0.0
        %915 = vmatmul.mubr.f32.gmra.mrb[0].mxu0 %v735
        %v916 = vpop.f32.mrb[0].mxu0
        %v917 = vadd.f32 %v838, %v916
        %v918 = vpop.f32.mrb[0].mxu0
        %919 = vmatprep.mubr.f32.mxu0 0.0
        %920 = vmatmul.mubr.f32.gmra.mrb[0].mxu0 %v738
        %v921 = vpop.f32.mrb[0].mxu0
        %v922 = vadd.f32 %v838, %v921
        %v923 = vpop.f32.mrb[0].mxu0
        %924 = vdwg.mxu0
        %v925 = vld [vmem:[%s491] sm:$0xff]
        %v926 = vld [vmem:[%s491 + $0x8] sm:$0xff]
        %v927 = vld [vmem:[%s491 + $0x10] sm:$0xff]
        %v928 = vld [vmem:[%s491 + $0x18] sm:$0xff]
        %v929 = vld [vmem:[%s491 + $0x20] sm:$0xff]
        %v930 = vld [vmem:[%s491 + $0x28] sm:$0xff]
        %v931 = vld [vmem:[%s491 + $0x30] sm:$0xff]
        %v932 = vld [vmem:[%s491 + $0x38] sm:$0xff]
        %v933 = vld [vmem:[%s578] sm:$0x1]
        %v935 = vlaneseq
        %v936 = vshrl.u32 %v935, 7
        %v937 = vsub.s32 0, %v936
        %v938 = vrot.slane %v933, %v937
        %940 = vmatprep.subr.mxu0 0.0
        %941 = vmatpush1.msra.mxu0 %v925
        %942 = vmatprep.subr.mxu0 0.0
        %943 = vmatpush1.msra.mxu0 %v926
        %944 = vmatprep.subr.mxu0 0.0
        %945 = vmatpush1.msra.mxu0 %v927
        %946 = vmatprep.subr.mxu0 0.0
        %947 = vmatpush1.msra.mxu0 %v928
        %948 = vmatprep.subr.mxu0 0.0
        %949 = vmatpush1.msra.mxu0 %v929
        %950 = vmatprep.subr.mxu0 0.0
        %951 = vmatpush1.msra.mxu0 %v930
        %952 = vmatprep.subr.mxu0 0.0
        %953 = vmatpush1.msra.mxu0 %v931
        %954 = vmatprep.subr.mxu0 0.0
        %955 = vmatpush1.msra.mxu0 %v932
        %956 = vmatprep.subr.mxu0 0.0
        %957 = vmatpush1.msra.mxu0 0.0
        %958 = vmatprep.subr.mxu0 0.0
        %959 = vmatpush1.msra.mxu0 0.0
        %960 = vmatprep.subr.mxu0 0.0
        %961 = vmatpush1.msra.mxu0 0.0
        %962 = vmatprep.subr.mxu0 0.0
        %963 = vmatpush1.msra.mxu0 0.0
        %964 = vmatprep.subr.mxu0 0.0
        %965 = vmatpush1.msra.mxu0 0.0
        %966 = vmatprep.subr.mxu0 0.0
        %967 = vmatpush1.msra.mxu0 0.0
        %968 = vmatprep.subr.mxu0 0.0
        %969 = vmatpush1.msra.mxu0 0.0
        %970 = vmatprep.subr.mxu0 0.0
        %971 = vmatpush1.msra.mxu0 0.0
        %972 = vmatprep.subr.mxu0 0.0
        %973 = vmatpush1.msra.mxu0 0.0
        %974 = vmatprep.subr.mxu0 0.0
        %975 = vmatpush1.msra.mxu0 0.0
        %976 = vmatprep.subr.mxu0 0.0
        %977 = vmatpush1.msra.mxu0 0.0
        %978 = vmatprep.subr.mxu0 0.0
        %979 = vmatpush1.msra.mxu0 0.0
        %980 = vmatprep.subr.mxu0 0.0
        %981 = vmatpush1.msra.mxu0 0.0
        %982 = vmatprep.subr.mxu0 0.0
        %983 = vmatpush1.msra.mxu0 0.0
        %984 = vmatprep.subr.mxu0 0.0
        %985 = vmatpush1.msra.mxu0 0.0
        %986 = vmatprep.subr.mxu0 0.0
        %987 = vmatpush1.msra.mxu0 0.0
        %988 = vmatprep.subr.mxu0 0.0
        %989 = vmatpush1.msra.mxu0 0.0
        %990 = vmatprep.subr.mxu0 0.0
        %991 = vmatpush1.msra.mxu0 0.0
        %992 = vmatprep.subr.mxu0 0.0
        %993 = vmatpush1.msra.mxu0 0.0
        %994 = vmatprep.subr.mxu0 0.0
        %995 = vmatpush1.msra.mxu0 0.0
        %996 = vmatprep.subr.mxu0 0.0
        %997 = vmatpush1.msra.mxu0 0.0
        %998 = vmatprep.subr.mxu0 0.0
        %999 = vmatpush1.msra.mxu0 0.0
        %1000 = vmatprep.subr.mxu0 0.0
        %1001 = vmatpush1.msra.mxu0 0.0
        %1002 = vmatprep.subr.mxu0 0.0
        %1003 = vmatpush1.msra.mxu0 0.0
        %1004 = vmatprep.mubr.f32.mxu0 0.0
        %1005 = vmatmul.mubr.f32.gmra.mrb[0].mxu0 %v729
        %v1006 = vpop.f32.mrb[0].mxu0
        %v1007 = vadd.f32 %v938, %v1006
        %v1008 = vpop.f32.mrb[0].mxu0
        %1009 = vmatprep.mubr.f32.mxu0 0.0
        %1010 = vmatmul.mubr.f32.gmra.mrb[0].mxu0 %v732
        %v1011 = vpop.f32.mrb[0].mxu0
        %v1012 = vadd.f32 %v938, %v1011
        %v1013 = vpop.f32.mrb[0].mxu0
        %1014 = vmatprep.mubr.f32.mxu0 0.0
        %1015 = vmatmul.mubr.f32.gmra.mrb[0].mxu0 %v735
        %v1016 = vpop.f32.mrb[0].mxu0
        %v1017 = vadd.f32 %v938, %v1016
        %v1018 = vpop.f32.mrb[0].mxu0
        %1019 = vmatprep.mubr.f32.mxu0 0.0
        %1020 = vmatmul.mubr.f32.gmra.mrb[0].mxu0 %v738
        %v1021 = vpop.f32.mrb[0].mxu0
        %v1022 = vadd.f32 %v938, %v1021
        %v1023 = vpop.f32.mrb[0].mxu0
        %1024 = vdwg.mxu0
        %v1025 = vmax.f32 %v807, 0.0
        %v1026 = vmax.f32 %v812, 0.0
        %v1027 = vmax.f32 %v817, 0.0
        %v1028 = vmax.f32 %v822, 0.0
        %vm1029 = vcmp.ne.f32.partialorder %v807, %v807
        %vm1030 = vcmp.ne.f32.partialorder %v812, %v812
        %vm1031 = vcmp.ne.f32.partialorder %v817, %v817
        %vm1032 = vcmp.ne.f32.partialorder %v822, %v822
        %v1033 = vadd.f32 %v807, 0.0
        %v1034 = vadd.f32 %v812, 0.0
        %v1035 = vadd.f32 %v817, 0.0
        %v1036 = vadd.f32 %v822, 0.0
        %v1037 = vand.u32 2147483647, %v807
        %v1038 = vand.u32 2147483647, %v812
        %v1039 = vand.u32 2147483647, %v817
        %v1040 = vand.u32 2147483647, %v822
        %v1041 = vsub.f32 0.0, %v1037
        %v1042 = vsub.f32 0.0, %v1038
        %v1043 = vsub.f32 0.0, %v1039
        %v1044 = vsub.f32 0.0, %v1040
        %v1045 = vmul.f32 %v1041, 1.442695
        %v1046 = vpow.pop %v1045
        %v1047 = vmul.f32 %v1042, 1.442695
        %v1048 = vpow.pop %v1047
        %v1049 = vmul.f32 %v1043, 1.442695
        %v1050 = vpow.pop %v1049
        %v1051 = vmul.f32 %v1044, 1.442695
        %v1052 = vpow.pop %v1051
        %v1053 = vadd.f32 %v1046, 1.0
        %v1054 = vlog2.pop %v1053
        %v1055 = vmul.f32 %v1054, 0.6931472
        %v1056 = vmul.f32 -0.5, %v1046
        %v1057 = vadd.f32 %v1056, 1.0
        %v1058 = vmul.f32 %v1057, %v1046
        %v1059 = vand.u32 2147483647, %v1046
        %vm1060 = vcmp.lt.f32.partialorder %v1059, 0.0004427343
        %v1061 = vsel %vm1060, %v1058, %v1055
        %v1062 = vadd.f32 %v1048, 1.0
        %v1063 = vlog2.pop %v1062
        %v1064 = vmul.f32 %v1063, 0.6931472
        %v1065 = vmul.f32 -0.5, %v1048
        %v1066 = vadd.f32 %v1065, 1.0
        %v1067 = vmul.f32 %v1066, %v1048
        %v1068 = vand.u32 2147483647, %v1048
        %vm1069 = vcmp.lt.f32.partialorder %v1068, 0.0004427343
        %v1070 = vsel %vm1069, %v1067, %v1064
        %v1071 = vadd.f32 %v1050, 1.0
        %v1072 = vlog2.pop %v1071
        %v1073 = vmul.f32 %v1072, 0.6931472
        %v1074 = vmul.f32 -0.5, %v1050
        %v1075 = vadd.f32 %v1074, 1.0
        %v1076 = vmul.f32 %v1075, %v1050
        %v1077 = vand.u32 2147483647, %v1050
        %vm1078 = vcmp.lt.f32.partialorder %v1077, 0.0004427343
        %v1079 = vsel %vm1078, %v1076, %v1073
        %v1080 = vadd.f32 %v1052, 1.0
        %v1081 = vlog2.pop %v1080
        %v1082 = vmul.f32 %v1081, 0.6931472
        %v1083 = vmul.f32 -0.5, %v1052
        %v1084 = vadd.f32 %v1083, 1.0
        %v1085 = vmul.f32 %v1084, %v1052
        %v1086 = vand.u32 2147483647, %v1052
        %vm1087 = vcmp.lt.f32.partialorder %v1086, 0.0004427343
        %v1088 = vsel %vm1087, %v1085, %v1082
        %v1089 = vadd.f32 %v1025, %v1061
        %v1090 = vadd.f32 %v1026, %v1070
        %v1091 = vadd.f32 %v1027, %v1079
        %v1092 = vadd.f32 %v1028, %v1088
        %v1093 = vsel %vm1029, %v1033, %v1089
        %v1094 = vsel %vm1030, %v1034, %v1090
        %v1095 = vsel %vm1031, %v1035, %v1091
        %v1096 = vsel %vm1032, %v1036, %v1092
        %v1097 = vmax.f32 %v907, 0.0
        %v1098 = vmax.f32 %v912, 0.0
        %v1099 = vmax.f32 %v917, 0.0
        %v1100 = vmax.f32 %v922, 0.0
        %vm1101 = vcmp.ne.f32.partialorder %v907, %v907
        %vm1102 = vcmp.ne.f32.partialorder %v912, %v912
        %vm1103 = vcmp.ne.f32.partialorder %v917, %v917
        %vm1104 = vcmp.ne.f32.partialorder %v922, %v922
        %v1105 = vadd.f32 %v907, 0.0
        %v1106 = vadd.f32 %v912, 0.0
        %v1107 = vadd.f32 %v917, 0.0
        %v1108 = vadd.f32 %v922, 0.0
        %v1109 = vand.u32 2147483647, %v907
        %v1110 = vand.u32 2147483647, %v912
        %v1111 = vand.u32 2147483647, %v917
        %v1112 = vand.u32 2147483647, %v922
        %v1113 = vsub.f32 0.0, %v1109
        %v1114 = vsub.f32 0.0, %v1110
        %v1115 = vsub.f32 0.0, %v1111
        %v1116 = vsub.f32 0.0, %v1112
        %v1117 = vmul.f32 %v1113, 1.442695
        %v1118 = vpow.pop %v1117
        %v1119 = vmul.f32 %v1114, 1.442695
        %v1120 = vpow.pop %v1119
        %v1121 = vmul.f32 %v1115, 1.442695
        %v1122 = vpow.pop %v1121
        %v1123 = vmul.f32 %v1116, 1.442695
        %v1124 = vpow.pop %v1123
        %v1125 = vadd.f32 %v1118, 1.0
        %v1126 = vlog2.pop %v1125
        %v1127 = vmul.f32 %v1126, 0.6931472
        %v1128 = vmul.f32 -0.5, %v1118
        %v1129 = vadd.f32 %v1128, 1.0
        %v1130 = vmul.f32 %v1129, %v1118
        %v1131 = vand.u32 2147483647, %v1118
        %vm1132 = vcmp.lt.f32.partialorder %v1131, 0.0004427343
        %v1133 = vsel %vm1132, %v1130, %v1127
        %v1134 = vadd.f32 %v1120, 1.0
        %v1135 = vlog2.pop %v1134
        %v1136 = vmul.f32 %v1135, 0.6931472
        %v1137 = vmul.f32 -0.5, %v1120
        %v1138 = vadd.f32 %v1137, 1.0
        %v1139 = vmul.f32 %v1138, %v1120
        %v1140 = vand.u32 2147483647, %v1120
        %vm1141 = vcmp.lt.f32.partialorder %v1140, 0.0004427343
        %v1142 = vsel %vm1141, %v1139, %v1136
        %v1143 = vadd.f32 %v1122, 1.0
        %v1144 = vlog2.pop %v1143
        %v1145 = vmul.f32 %v1144, 0.6931472
        %v1146 = vmul.f32 -0.5, %v1122
        %v1147 = vadd.f32 %v1146, 1.0
        %v1148 = vmul.f32 %v1147, %v1122
        %v1149 = vand.u32 2147483647, %v1122
        %vm1150 = vcmp.lt.f32.partialorder %v1149, 0.0004427343
        %v1151 = vsel %vm1150, %v1148, %v1145
        %v1152 = vadd.f32 %v1124, 1.0
        %v1153 = vlog2.pop %v1152
        %v1154 = vmul.f32 %v1153, 0.6931472
        %v1155 = vmul.f32 -0.5, %v1124
        %v1156 = vadd.f32 %v1155, 1.0
        %v1157 = vmul.f32 %v1156, %v1124
        %v1158 = vand.u32 2147483647, %v1124
        %vm1159 = vcmp.lt.f32.partialorder %v1158, 0.0004427343
        %v1160 = vsel %vm1159, %v1157, %v1154
        %v1161 = vadd.f32 %v1097, %v1133
        %v1162 = vadd.f32 %v1098, %v1142
        %v1163 = vadd.f32 %v1099, %v1151
        %v1164 = vadd.f32 %v1100, %v1160
        %v1165 = vsel %vm1101, %v1105, %v1161
        %v1166 = vsel %vm1102, %v1106, %v1162
        %v1167 = vsel %vm1103, %v1107, %v1163
        %v1168 = vsel %vm1104, %v1108, %v1164
        %v1169 = vadd.f32 %v1165, 0.0001
        %v1170 = vadd.f32 %v1166, 0.0001
        %v1171 = vadd.f32 %v1167, 0.0001
        %v1172 = vadd.f32 %v1168, 0.0001
        %v1173 = vxor.u32 %v1007, 2147483648
        %v1174 = vxor.u32 %v1012, 2147483648
        %v1175 = vxor.u32 %v1017, 2147483648
        %v1176 = vxor.u32 %v1022, 2147483648
        %v1177 = vmul.f32 %v1173, 1.442695
        %v1178 = vpow.pop %v1177
        %v1179 = vmul.f32 %v1174, 1.442695
        %v1180 = vpow.pop %v1179
        %v1181 = vmul.f32 %v1175, 1.442695
        %v1182 = vpow.pop %v1181
        %v1183 = vmul.f32 %v1176, 1.442695
        %v1184 = vpow.pop %v1183
        %v1185 = vadd.f32 %v1178, 1.0
        %v1186 = vadd.f32 %v1180, 1.0
        %v1187 = vadd.f32 %v1182, 1.0
        %v1188 = vadd.f32 %v1184, 1.0
        %v1189 = vrcp.pop %v1185
        %v1190 = vmul.f32 1.0, %v1189
        %v1191 = vrcp.pop %v1186
        %v1192 = vmul.f32 1.0, %v1191
        %v1193 = vrcp.pop %v1187
        %v1194 = vmul.f32 1.0, %v1193
        %v1195 = vrcp.pop %v1188
        %v1196 = vmul.f32 1.0, %v1195
        %v1197 = vadd.f32 %v1169, %v1093
        %v1198 = vadd.f32 %v1170, %v1094
        %v1199 = vadd.f32 %v1171, %v1095
        %v1200 = vadd.f32 %v1172, %v1096
        %v1201 = vrcp.pop %v1197
        %v1202 = vmul.f32 %v1169, %v1201
        %v1203 = vrcp.pop %v1198
        %v1204 = vmul.f32 %v1170, %v1203
        %v1205 = vrcp.pop %v1199
        %v1206 = vmul.f32 %v1171, %v1205
        %v1207 = vrcp.pop %v1200
        %v1208 = vmul.f32 %v1172, %v1207
        %v1209 = vmax.f32 %v1202, 1e-05
        %v1210 = vmax.f32 %v1204, 1e-05
        %v1211 = vmax.f32 %v1206, 1e-05
        %v1212 = vmax.f32 %v1208, 1e-05
        %v1213 = vmin.f32 %v1209, 0.99999
        %v1214 = vmin.f32 %v1210, 0.99999
        %v1215 = vmin.f32 %v1211, 0.99999
        %v1216 = vmin.f32 %v1212, 0.99999
        %1217 = vst [vmem:[%s549] sm:$0xff] %v1169
        %1218 = vst [vmem:[%s549 + $0x8] sm:$0xff] %v1170
        %1219 = vst [vmem:[%s549 + $0x10] sm:$0xff] %v1171
        %1220 = vst [vmem:[%s549 + $0x18] sm:$0xff] %v1172
        %1221 = vst [vmem:[%s556] sm:$0xff] %v1213
        %1222 = vst [vmem:[%s556 + $0x8] sm:$0xff] %v1214
        %1223 = vst [vmem:[%s556 + $0x10] sm:$0xff] %v1215
        %1224 = vst [vmem:[%s556 + $0x18] sm:$0xff] %v1216
        %1225 = vst [vmem:[%s563] sm:$0xff] %v1190
        %1226 = vst [vmem:[%s563 + $0x8] sm:$0xff] %v1192
        %1227 = vst [vmem:[%s563 + $0x10] sm:$0xff] %v1194
        %1228 = vst [vmem:[%s563 + $0x18] sm:$0xff] %v1196
        %s1229 = sand.u32 %s281, 1
        %s1230 = scalar_lea.sflag [#allocation5], %s1229
        %s1231 = sand.u32 %s281, 1
        %s1232 = smul.addr %s1231, 32
        %s1233 = scalar_lea.vmem [#allocation9], %s1232
        %s1234 = sand.u32 %s35, 1
        %s1235 = scalar_lea.sflag [#allocation11], %s1234
        %s1236 = sand.u32 %s309, 1
        %s1237 = smul.addr %s1236, 32
        %s1238 = scalar_lea.vmem [#allocation10], %s1237
        %s1239 = sand.u32 %s35, 1
        %s1240 = scalar_lea.sflag [#allocation11], %s1239
        %s1241 = sand.u32 %s337, 1
        %s1242 = smul.addr %s1241, 32
        %s1243 = scalar_lea.vmem [#allocation12], %s1242
        // Predicated region
        $region73: #{tpu_custom_call.1} parent=55 // pred_check
          %p1244 = pneg %p291
        $region74: #{tpu_custom_call.1} parent=55 // pred_check_branch
          %1246 = sbr.rel (%p1244) target = $region76
        $region75: #{tpu_custom_call.1} parent=55 // pred_region
          %s1247 = smul.u32 4, %s39
          %s1249 = ssub.s32 512, 512
          %1250 = vsyncadd %s1230, %s1249
          %s1251 = smul.addr %s1247, 2
          %s1252 = sadd.s32 %s40, %s1251
          %s1253 = smul.addr %s1252, 128
          %s1254 = scalar_lea.hbm %s9, %s1253
          %s1255 = sshll.u32 %s1233, 4
          %s1256 = int_to_ptr.vmem [resolvable:$true] %s1255
          %1261 = dma.vmem_to_hbm [thread:$0]  %s1256, 512, %s1254, %s1230, 128, 256, 8
        $region76: #{tpu_custom_call.1} parent=55 // pred_fallthru
          _
        // Predicated region
        $region77: #{tpu_custom_call.1} parent=55 // pred_check
          %p1262 = pneg %p319
        $region78: #{tpu_custom_call.1} parent=55 // pred_check_branch
          %1264 = sbr.rel (%p1262) target = $region80
        $region79: #{tpu_custom_call.1} parent=55 // pred_region
          %s1265 = smul.u32 4, %s39
          %s1267 = ssub.s32 512, 512
          %1268 = vsyncadd %s1235, %s1267
          %s1269 = smul.addr %s1265, 2
          %s1270 = sadd.s32 %s40, %s1269
          %s1271 = smul.addr %s1270, 128
          %s1272 = scalar_lea.hbm %s10, %s1271
          %s1273 = sshll.u32 %s1238, 4
          %s1274 = int_to_ptr.vmem [resolvable:$true] %s1273
          %1279 = dma.vmem_to_hbm [thread:$0]  %s1274, 512, %s1272, %s1235, 128, 256, 8
        $region80: #{tpu_custom_call.1} parent=55 // pred_fallthru
          _
        // Predicated region
        $region81: #{tpu_custom_call.1} parent=55 // pred_check
          %p1280 = pneg %p347
        $region82: #{tpu_custom_call.1} parent=55 // pred_check_branch
          %1282 = sbr.rel (%p1280) target = $region84
        $region83: #{tpu_custom_call.1} parent=55 // pred_region
          %s1283 = smul.u32 4, %s39
          %s1285 = ssub.s32 512, 512
          %1286 = vsyncadd %s1240, %s1285
          %s1287 = smul.addr %s1283, 2
          %s1288 = sadd.s32 %s40, %s1287
          %s1289 = smul.addr %s1288, 128
          %s1290 = scalar_lea.hbm %s11, %s1289
          %s1291 = sshll.u32 %s1243, 4
          %s1292 = int_to_ptr.vmem [resolvable:$true] %s1291
          %1297 = dma.vmem_to_hbm [thread:$0]  %s1292, 512, %s1290, %s1240, 128, 256, 8
        $region84: #{tpu_custom_call.1} parent=55 // pred_fallthru
          _
      $region56: #{tpu_custom_call.1} parent=5 // pred_fallthru
        _
      %p1298 = scmp.le.s32.totalorder 2, %s30
      // Predicated region
      $region85: #{tpu_custom_call.1} parent=5 // pred_check
        %p1299 = pneg %p1298
      $region86: #{tpu_custom_call.1} parent=5 // pred_check_branch
        %1301 = sbr.rel (%p1299) target = $region88
      $region87: #{tpu_custom_call.1} parent=5 // pred_region
        %s1302 = ssub.s32 %s30, 2
        // Predicated region
        $region89: #{tpu_custom_call.1} parent=87 // pred_check
          %p1303 = pneg %p297
        $region90: #{tpu_custom_call.1} parent=87 // pred_check_branch
          %1305 = sbr.rel (%p1303) target = $region92
        $region91: #{tpu_custom_call.1} parent=87 // pred_region
          %s1306 = sand.u32 %s282, 1
          %s1307 = scalar_lea.sflag [#allocation5], %s1306
          %s1308 = sand.u32 %s282, 1
          %s1309 = smul.addr %s1308, 32
          %s1310 = scalar_lea.vmem [#allocation9], %s1309
          %1311 = dma.done %s1307, 512
        $region92: #{tpu_custom_call.1} parent=87 // pred_fallthru
          _
        // Predicated region
        $region93: #{tpu_custom_call.1} parent=87 // pred_check
          %p1312 = pneg %p325
        $region94: #{tpu_custom_call.1} parent=87 // pred_check_branch
          %1314 = sbr.rel (%p1312) target = $region96
        $region95: #{tpu_custom_call.1} parent=87 // pred_region
          %s1315 = sand.u32 %s36, 1
          %s1316 = scalar_lea.sflag [#allocation11], %s1315
          %s1317 = sand.u32 %s310, 1
          %s1318 = smul.addr %s1317, 32
          %s1319 = scalar_lea.vmem [#allocation10], %s1318
          %1320 = dma.done %s1316, 512
        $region96: #{tpu_custom_call.1} parent=87 // pred_fallthru
          _
        // Predicated region
        $region97: #{tpu_custom_call.1} parent=87 // pred_check
          %p1321 = pneg %p353
        $region98: #{tpu_custom_call.1} parent=87 // pred_check_branch
          %1323 = sbr.rel (%p1321) target = $region100
        $region99: #{tpu_custom_call.1} parent=87 // pred_region
          %s1324 = sand.u32 %s36, 1
          %s1325 = scalar_lea.sflag [#allocation11], %s1324
          %s1326 = sand.u32 %s338, 1
          %s1327 = smul.addr %s1326, 32
          %s1328 = scalar_lea.vmem [#allocation12], %s1327
          %1329 = dma.done %s1325, 512
        $region100: #{tpu_custom_call.1} parent=87 // pred_fallthru
          _
      $region88: #{tpu_custom_call.1} parent=5 // pred_fallthru
        _
    $region6: #{tpu_custom_call.1} parent=1 // loop_footer
      %s34 = sadd.s32 1, %s30
    $region7: #{tpu_custom_call.1} parent=1 // loop_footer_branch
      %29 = sbr.rel target = $region3
    $region8: #{tpu_custom_call.1} parent=1 // loop_exit
      _
    %1330 = vsyncpa [#allocation4], 1
    %s1331 = scalar_lea.sflag [#allocation4], 1
    %1332 = vsyncpa %s1331, 1
    %1333 = vsyncpa [#allocation7], 1
    %s1334 = scalar_lea.sflag [#allocation7], 1
    %1335 = vsyncpa %s1334, 1
    %1336 = vsyncpa [#allocation5], 1
    %s1337 = scalar_lea.sflag [#allocation5], 1
    %1338 = vsyncpa %s1337, 1
    %1339 = vsyncpa [#allocation11], 1
    %s1340 = scalar_lea.sflag [#allocation11], 1
    %1341 = vsyncpa %s1340, 1

</llo_original>
